<compile_context>
chip_gen: v7x
topology: tpu7x:2x2x1
jax: 0.10.0
libtpu: 0.0.40
codegen_flags: <defaults>
</compile_context>

<pallas_src>
import functools
import math

import jax
import jax.numpy as jnp
from jax.experimental import pallas as pl
from jax.experimental.pallas import tpu as pltpu


_VMEM_WORKSET_BUDGET = 40 << 20   # target resident working set (headroom on v7x 64 MiB)
_VMEM_LIMIT_BYTES = 48 << 20      # Mosaic scoped-VMEM limit (< v7x physical 64 MiB)


# ---------------------------------------------------------------- fused path ---


def _appnp_fused_kernel(x_ref, w_ref, b_ref, a_ref, o_ref, *, k, alpha):
    # Linear: h0 = x @ W + b  (bf16 MXU inputs, f32 accumulation).
    h = jnp.dot(x_ref[...], w_ref[...], preferred_element_type=jnp.float32) + b_ref[...]
    h0a = alpha * h                       # alpha * h0, computed once
    scale = 1.0 - alpha                   # folded in-kernel (rides a spare VALU slot)
    # k is a small static int -> unrolled propagation loop; A_hat stays resident.
    for _ in range(k):
        h = scale * jnp.dot(a_ref[...], h.astype(jnp.bfloat16),
                            preferred_element_type=jnp.float32) + h0a
    o_ref[...] = h.astype(o_ref.dtype)


def _appnp_fused(x_bf, w_bf, b2d, a_bf, *, k, alpha):
    n = x_bf.shape[0]
    d_out = w_bf.shape[1]
    vmem_spec = pl.BlockSpec(memory_space=pltpu.MemorySpace.VMEM)
    return pl.pallas_call(
        functools.partial(_appnp_fused_kernel, k=k, alpha=alpha),
        out_shape=jax.ShapeDtypeStruct((n, d_out), jnp.float32),
        in_specs=[vmem_spec] * 4,
        out_specs=vmem_spec,
        compiler_params=pltpu.CompilerParams(vmem_limit_bytes=_VMEM_LIMIT_BYTES),
    )(x_bf, w_bf, b2d, a_bf)


# ------------------------------------------------------------ streaming path ---


def _linear_kernel(x_ref, w_ref, b_ref, h_ref, h0a_ref, *, alpha):
    acc = jnp.dot(x_ref[...], w_ref[...], preferred_element_type=jnp.float32) + b_ref[...]
    h_ref[...] = acc.astype(h_ref.dtype)               # bf16 feed for propagation matmuls
    h0a_ref[...] = (alpha * acc).astype(h0a_ref.dtype)  # alpha * h0, f32


def _linear(x_bf, w_bf, b2d, *, tile_n, alpha):
    n, d_in = x_bf.shape
    d_out = w_bf.shape[1]
    return pl.pallas_call(
        functools.partial(_linear_kernel, alpha=alpha),
        out_shape=(jax.ShapeDtypeStruct((n, d_out), jnp.bfloat16),
                   jax.ShapeDtypeStruct((n, d_out), jnp.float32)),
        grid_spec=pltpu.PrefetchScalarGridSpec(
            num_scalar_prefetch=0,
            grid=(n // tile_n,),
            in_specs=[
                pl.BlockSpec((tile_n, d_in), lambda i: (i, 0)),
                pl.BlockSpec((d_in, d_out), lambda i: (0, 0)),
                pl.BlockSpec((1, d_out), lambda i: (0, 0)),
            ],
            out_specs=(pl.BlockSpec((tile_n, d_out), lambda i: (i, 0)),
                       pl.BlockSpec((tile_n, d_out), lambda i: (i, 0))),
        ),
        compiler_params=pltpu.CompilerParams(
            dimension_semantics=("parallel",),
            vmem_limit_bytes=_VMEM_LIMIT_BYTES),
    )(x_bf, w_bf, b2d)


def _prop_step_kernel(a_ref, h_ref, h0a_ref, o_ref, *, alpha):
    # out_tile = (1 - alpha) * A[row_tile, :] @ h  +  (alpha * h0)[row_tile]
    # h is a single VMEM-resident (N, D) block -> no contraction grid axis, no
    # accumulator scratch, no pl.when init/finalize.
    acc = jnp.dot(a_ref[...], h_ref[...], preferred_element_type=jnp.float32)
    o_ref[...] = ((1.0 - alpha) * acc + h0a_ref[...]).astype(o_ref.dtype)


def _prop_step(a_bf, h_bf, h0a, *, tile_n, alpha, out_dtype):
    n = a_bf.shape[0]
    d = h_bf.shape[1]
    return pl.pallas_call(
        functools.partial(_prop_step_kernel, alpha=alpha),
        out_shape=jax.ShapeDtypeStruct((n, d), out_dtype),
        grid_spec=pltpu.PrefetchScalarGridSpec(
            num_scalar_prefetch=0,
            grid=(n // tile_n,),
            in_specs=[
                pl.BlockSpec((tile_n, n), lambda i: (i, 0)),   # A row slab (streams)
                pl.BlockSpec((n, d), lambda i: (0, 0)),        # h: VMEM-resident
                pl.BlockSpec((tile_n, d), lambda i: (i, 0)),   # alpha * h0
            ],
            out_specs=pl.BlockSpec((tile_n, d), lambda i: (i, 0)),
        ),
        compiler_params=pltpu.CompilerParams(
            dimension_semantics=("parallel",),
            vmem_limit_bytes=_VMEM_LIMIT_BYTES),
    )(a_bf, h_bf, h0a)


def _pick_stream_tile(n_pad, d):
    """Largest row tile whose double-buffered A slab + resident h fit the budget."""
    for t in (1024, 512, 256, 128):
        if n_pad % t != 0:
            continue
        need = (2 * t * n_pad * 2          # double-buffered bf16 A slab
                + 2 * n_pad * d * 2        # resident bf16 h (x2 safety)
                + 2 * t * d * 4            # double-buffered f32 h0a
                + 2 * t * d * 4)           # double-buffered output
        if need <= _VMEM_WORKSET_BUDGET:
            return t
    # TODO(synk): for extremely large N even a 128-row slab + resident h exceeds
    #             VMEM; that regime needs contraction tiling (accumulator) again.
    return 128


# ----------------------------------------------------------------- forward ----


def appnp_forward(x, weight, bias, a_hat, *, k=2, alpha=0.1, force_stream=False):
    """x: [N, D_in], weight: [D_out, D_in] (torch layout), bias: [D_out], a_hat: [N, N]."""
    n, d_in = x.shape
    d_out = weight.shape[0]

    x_bf = x.astype(jnp.bfloat16)
    w_bf = weight.T.astype(jnp.bfloat16)                 # [D_in, D_out]
    b2d = bias.reshape(1, d_out).astype(jnp.float32)
    a_bf = a_hat.astype(jnp.bfloat16)                    # single cast; (1-alpha) folded in-kernel

    # Fused single-call path whenever A_hat + activations fit comfortably in VMEM.
    fused_bytes = n * n * 2 + 10 * n * max(d_in, d_out) * 4 + d_in * d_out * 2
    if not force_stream and fused_bytes <= _VMEM_WORKSET_BUDGET:
        return _appnp_fused(x_bf, w_bf, b2d, a_bf, k=k, alpha=alpha)

    # Streaming path: pad N to a multiple of 128 so row tiles stay (8,128)-aligned.
    n_pad = ((n + 127) // 128) * 128
    tile_n = _pick_stream_tile(n_pad, d_out)
    if n_pad != n:
        pad = n_pad - n
        x_bf = jnp.pad(x_bf, ((0, pad), (0, 0)))
        a_bf = jnp.pad(a_bf, ((0, pad), (0, pad)))

    h, h0a = _linear(x_bf, w_bf, b2d, tile_n=tile_n, alpha=alpha)
    if k == 0:
        return h.astype(jnp.float32)[:n]
    for it in range(k):
        out_dtype = jnp.float32 if it == k - 1 else jnp.bfloat16
        h = _prop_step(a_bf, h, h0a, tile_n=tile_n, alpha=alpha, out_dtype=out_dtype)
    return h[:n]


# --------------------------------------------------------------------- glue ---


def normalize_adjacency(adj):
    """A_hat = D^{-1/2} A D^{-1/2}, degrees clamped to >= 1 (DGL semantics)."""
    in_deg = jnp.clip(adj.sum(axis=1), 1.0, None)
    out_deg = jnp.clip(adj.sum(axis=0), 1.0, None)
    return jax.lax.rsqrt(in_deg)[:, None] * adj * jax.lax.rsqrt(out_deg)[None, :]


def appnp_reference(x, weight, bias, a_hat, *, k=2, alpha=0.1, match_bf16=False):
    if match_bf16:
        xb = x.astype(jnp.bfloat16)
        wb = weight.T.astype(jnp.bfloat16)
        ab = a_hat.astype(jnp.bfloat16)
        h = jnp.dot(xb, wb, preferred_element_type=jnp.float32) + bias
        h0a = alpha * h
        for _ in range(k):
            h = (1.0 - alpha) * jnp.dot(ab, h.astype(jnp.bfloat16),
                                        preferred_element_type=jnp.float32) + h0a
        return h
    h = x @ weight.T + bias
    h0a = alpha * h
    for _ in range(k):
        h = (1.0 - alpha) * (a_hat @ h) + h0a
    return h


if __name__ == "__main__":
    # Module config: dim=32, hidden_dim_multiplier=4 -> feature dim 128; k=2, alpha=0.1.
    dim, hidden_dim_multiplier = 32, 4
    D = dim * hidden_dim_multiplier          # 128
    N = 512                                  # nodes
    k, alpha = 2, 0.1

    key = jax.random.PRNGKey(0)
    k_x, k_w, k_b, k_a = jax.random.split(key, 4)

    x = jax.random.normal(k_x, (N, D), dtype=jnp.float32)

    bound_w = 1.0 / math.sqrt(D)
    weight = jax.random.uniform(k_w, (D, D), jnp.float32, -bound_w, bound_w)  # [out, in]
    bias = jax.random.uniform(k_b, (D,), jnp.float32, -bound_w, bound_w)

    # Random symmetric adjacency (~5% density) with self-loops, then normalization.
    a_raw = (jax.random.uniform(k_a, (N, N)) < 0.05).astype(jnp.float32)
    adj = jnp.maximum(a_raw, a_raw.T)
    adj = jnp.maximum(adj, jnp.eye(N, dtype=jnp.float32))
    a_hat = normalize_adjacency(adj)

    # Fused single-kernel path (default at this size).
    out = appnp_forward(x, weight, bias, a_hat, k=k, alpha=alpha)
    out = jax.block_until_ready(out)
    assert out.shape == (N, D)

    # Streaming (tiled, A-from-HBM) path, exercised for coverage.
    out_stream = appnp_forward(x, weight, bias, a_hat, k=k, alpha=alpha, force_stream=True)
    out_stream = jax.block_until_ready(out_stream)
    assert out_stream.shape == (N, D)

    # Strict check vs. a reference with identical bf16 rounding of inputs / h.
    ref_bf = appnp_reference(x, weight, bias, a_hat, k=k, alpha=alpha, match_bf16=True)
    assert jnp.allclose(out, ref_bf, atol=2e-3, rtol=2e-3), "fused mismatch vs bf16 reference"
    assert jnp.allclose(out_stream, ref_bf, atol=2e-3, rtol=2e-3), "stream mismatch vs bf16 reference"
    assert jnp.allclose(out, out_stream, atol=2e-3, rtol=2e-3), "fused vs stream mismatch"

    # Looser sanity check vs. the pure-f32 reference (bf16 input rounding noise).
    ref_f32 = appnp_reference(x, weight, bias, a_hat, k=k, alpha=alpha, match_bf16=False)
    assert jnp.allclose(out, ref_f32, atol=5e-2, rtol=5e-2), "mismatch vs f32 reference"

    print("KERNEL_OK")
</pallas_src>

<mosaic_0001>
module attributes {stable_mosaic.version = 11 : i64} {
  func.func @_appnp_fused_kernel(%arg0: memref<512x128xbf16, #tpu.memory_space<vmem>>, %arg1: memref<128x128xbf16, #tpu.memory_space<vmem>>, %arg2: memref<1x128xf32, #tpu.memory_space<vmem>>, %arg3: memref<512x512xbf16, #tpu.memory_space<vmem>>, %arg4: memref<512x128xf32, #tpu.memory_space<vmem>>) attributes {dimension_semantics = [], scalar_prefetch = 0 : i64, scratch_operands = 0 : i64, tpu.core_type = #tpu.core_type<tc>} {
    %c0 = arith.constant 0 : index
    %c0_0 = arith.constant 0 : index
    %0 = vector.load %arg0[%c0, %c0_0] : memref<512x128xbf16, #tpu.memory_space<vmem>>, vector<512x128xbf16>
    %c0_1 = arith.constant 0 : index
    %c0_2 = arith.constant 0 : index
    %1 = vector.load %arg1[%c0_1, %c0_2] : memref<128x128xbf16, #tpu.memory_space<vmem>>, vector<128x128xbf16>
    %cst = arith.constant dense<0.000000e+00> : vector<512x128xf32>
    %2 = tpu.matmul %0, %1, %cst {dimension_numbers = #tpu.dot_dimension_numbers<[1], [0], [0], [1], [0, 0, 1, 1], [], []>} : vector<512x128xbf16>, vector<128x128xbf16>, vector<512x128xf32> -> vector<512x128xf32>
    %c0_3 = arith.constant 0 : index
    %c0_4 = arith.constant 0 : index
    %3 = vector.load %arg2[%c0_3, %c0_4] : memref<1x128xf32, #tpu.memory_space<vmem>>, vector<1x128xf32>
    %4 = vector.broadcast %3 : vector<1x128xf32> to vector<512x128xf32>
    %5 = arith.addf %2, %4 : vector<512x128xf32>
    %cst_5 = arith.constant 1.000000e-01 : f32
    %6 = vector.broadcast %cst_5 : f32 to vector<512x128xf32>
    %7 = arith.mulf %6, %5 : vector<512x128xf32>
    %c0_6 = arith.constant 0 : index
    %c0_7 = arith.constant 0 : index
    %8 = vector.load %arg3[%c0_6, %c0_7] : memref<512x512xbf16, #tpu.memory_space<vmem>>, vector<512x512xbf16>
    %9 = arith.truncf %5 : vector<512x128xf32> to vector<512x128xbf16>
    %cst_8 = arith.constant dense<0.000000e+00> : vector<512x128xf32>
    %10 = tpu.matmul %8, %9, %cst_8 {dimension_numbers = #tpu.dot_dimension_numbers<[1], [0], [0], [1], [0, 0, 1, 1], [], []>} : vector<512x512xbf16>, vector<512x128xbf16>, vector<512x128xf32> -> vector<512x128xf32>
    %cst_9 = arith.constant 0.899999976 : f32
    %11 = vector.broadcast %cst_9 : f32 to vector<512x128xf32>
    %12 = arith.mulf %11, %10 : vector<512x128xf32>
    %13 = arith.addf %12, %7 : vector<512x128xf32>
    %c0_10 = arith.constant 0 : index
    %c0_11 = arith.constant 0 : index
    %14 = vector.load %arg3[%c0_10, %c0_11] : memref<512x512xbf16, #tpu.memory_space<vmem>>, vector<512x512xbf16>
    %15 = arith.truncf %13 : vector<512x128xf32> to vector<512x128xbf16>
    %cst_12 = arith.constant dense<0.000000e+00> : vector<512x128xf32>
    %16 = tpu.matmul %14, %15, %cst_12 {dimension_numbers = #tpu.dot_dimension_numbers<[1], [0], [0], [1], [0, 0, 1, 1], [], []>} : vector<512x512xbf16>, vector<512x128xbf16>, vector<512x128xf32> -> vector<512x128xf32>
    %cst_13 = arith.constant 0.899999976 : f32
    %17 = vector.broadcast %cst_13 : f32 to vector<512x128xf32>
    %18 = arith.mulf %17, %16 : vector<512x128xf32>
    %19 = arith.addf %18, %7 : vector<512x128xf32>
    %c0_14 = arith.constant 0 : index
    %c0_15 = arith.constant 0 : index
    %20 = vector.load %arg4[%c0_14, %c0_15] : memref<512x128xf32, #tpu.memory_space<vmem>>, vector<512x128xf32>
    tpu.vector_store %arg4[%c0_14, %c0_15], %19 {strides = array<i32>} : memref<512x128xf32, #tpu.memory_space<vmem>>, vector<512x128xf32>,
    return
  }
}

</mosaic_0001>

<llo_original>
// kernel: tpu_custom_call.1
$region0: #{tpu_custom_call.1}
  #allocation0 [shape = 'u32[]', space=smem, size = 0x4, offset = 0x4, fixed_abs, tag = 'smem constant byte address 0x4 - core index']
  #allocation1 [shape = 'u32[144,128]{1,0:T(1,128)}', space=vmem, size = 0x12000, scoped, tag = 'internal scratch']
  %s0 = inlined_call_operand.hbm [shape: bf16[512,128], index: 0, kind: input, shape index: {}]
  %s1 = inlined_call_operand.hbm [shape: bf16[128,128], index: 1, kind: input, shape index: {}]
  %s2 = inlined_call_operand.vmem [shape: f32[1,128], index: 2, kind: input, shape index: {}]
  %s3 = inlined_call_operand.hbm [shape: bf16[512,512], index: 3, kind: input, shape index: {}]
  %s4 = inlined_call_operand.hbm [shape: f32[512,128], index: 4, kind: output, shape index: {}]
  %s5 = sld [smem:[#allocation0]]
  $region38: #{tpu_custom_call.1} parent=0
    _
  %s7 = ssub.s32 1, %s5
  %s8 = scalar_select 0, %s7, %s5
  $region1: #{tpu_custom_call.1} parent=0
    #allocation2 [shape = 'u8[131072]{0}', space=vmem, size = 0x20000, scoped, tag = 'input window, operand 0, single buffered']
    #allocation3 [shape = 's32[1]{0}', space=sflag, size = 0x4, scoped, tag = 'scoped memory for tpu_custom_call.1']
    #allocation4 [shape = 's32[1]{0}', space=sflag, size = 0x4, scoped, tag = 'scoped memory for tpu_custom_call.1']
    #allocation5 [shape = 'u8[32768]{0}', space=vmem, size = 0x8000, scoped, tag = 'input window, operand 1, single buffered']
    #allocation6 [shape = 's32[1]{0}', space=sflag, size = 0x4, scoped, tag = 'scoped memory for tpu_custom_call.1']
    #allocation7 [shape = 'u8[524288]{0}', space=vmem, size = 0x80000, scoped, tag = 'input window, operand 3, single buffered']
    #allocation8 [shape = 'u8[262144]{0}', space=vmem, size = 0x40000, scoped, tag = 'output window, operand 0, single buffered']
    %9 = vsyncpa [#allocation3], 0
    %10 = vsyncpa [#allocation6], 0
    %11 = vsyncpa [#allocation4], 0
    // Predicated region
    $region2: #{tpu_custom_call.1} parent=1 // pred_check
      _
    $region3: #{tpu_custom_call.1} parent=1 // pred_check_branch
      %13 = sbr.rel (0) target = $region5
    $region4: #{tpu_custom_call.1} parent=1 // pred_region
      %s15 = ssub.s32 4096, 4096
      %16 = vsyncadd [#allocation3], %s15
      %s17 = sshll.u32 [#allocation2], 4
      %s18 = int_to_ptr.vmem [resolvable:$true] %s17
      %23 = dma.hbm_to_vmem [thread:$0]  %s0, 4096, %s18, [#allocation3], 64, 64, 4
    $region5: #{tpu_custom_call.1} parent=1 // pred_fallthru
      _
    // Predicated region
    $region6: #{tpu_custom_call.1} parent=1 // pred_check
      _
    $region7: #{tpu_custom_call.1} parent=1 // pred_check_branch
      %25 = sbr.rel (0) target = $region9
    $region8: #{tpu_custom_call.1} parent=1 // pred_region
      %s27 = ssub.s32 1024, 1024
      %28 = vsyncadd [#allocation6], %s27
      %s29 = sshll.u32 [#allocation5], 4
      %s30 = int_to_ptr.vmem [resolvable:$true] %s29
      %35 = dma.hbm_to_vmem [thread:$0]  %s1, 1024, %s30, [#allocation6], 64, 64, 4
    $region9: #{tpu_custom_call.1} parent=1 // pred_fallthru
      _
    // Predicated region
    $region10: #{tpu_custom_call.1} parent=1 // pred_check
      _
    $region11: #{tpu_custom_call.1} parent=1 // pred_check_branch
      %37 = sbr.rel (0) target = $region13
    $region12: #{tpu_custom_call.1} parent=1 // pred_region
      _
    $region13: #{tpu_custom_call.1} parent=1 // pred_fallthru
      _
    // Predicated region
    $region14: #{tpu_custom_call.1} parent=1 // pred_check
      _
    $region15: #{tpu_custom_call.1} parent=1 // pred_check_branch
      %39 = sbr.rel (0) target = $region17
    $region16: #{tpu_custom_call.1} parent=1 // pred_region
      %s41 = ssub.s32 16384, 16384
      %42 = vsyncadd [#allocation6], %s41
      %s43 = sshll.u32 [#allocation7], 4
      %s44 = int_to_ptr.vmem [resolvable:$true] %s43
      %49 = dma.hbm_to_vmem [thread:$0]  %s3, 16384, %s44, [#allocation6], 256, 256, 16
    $region17: #{tpu_custom_call.1} parent=1 // pred_fallthru
      _
    // Predicated region
    $region18: #{tpu_custom_call.1} parent=1 // pred_check
      _
    $region19: #{tpu_custom_call.1} parent=1 // pred_check_branch
      %51 = sbr.rel (0) target = $region21
    $region20: #{tpu_custom_call.1} parent=1 // pred_region
      %52 = dma.done [#allocation3], 4096
    $region21: #{tpu_custom_call.1} parent=1 // pred_fallthru
      _
    // Predicated region
    $region22: #{tpu_custom_call.1} parent=1 // pred_check
      _
    $region23: #{tpu_custom_call.1} parent=1 // pred_check_branch
      %54 = sbr.rel (0) target = $region25
    $region24: #{tpu_custom_call.1} parent=1 // pred_region
      %55 = dma.done [#allocation6], 1024
    $region25: #{tpu_custom_call.1} parent=1 // pred_fallthru
      _
    // Predicated region
    $region26: #{tpu_custom_call.1} parent=1 // pred_check
      _
    $region27: #{tpu_custom_call.1} parent=1 // pred_check_branch
      %57 = sbr.rel (0) target = $region29
    $region28: #{tpu_custom_call.1} parent=1 // pred_region
      %58 = dma.done [#allocation6], 16384
    $region29: #{tpu_custom_call.1} parent=1 // pred_fallthru
      _
    %v60 = vld [vmem:[#allocation2] sm:$0xf]
    %v61 = vld [vmem:[#allocation2 + $0x4] sm:$0xf]
    %v62 = vld [vmem:[#allocation2 + $0x8] sm:$0xf]
    %v63 = vld [vmem:[#allocation2 + $0xc] sm:$0xf]
    %v64 = vld [vmem:[#allocation2 + $0x10] sm:$0xf]
    %v65 = vld [vmem:[#allocation2 + $0x14] sm:$0xf]
    %v66 = vld [vmem:[#allocation2 + $0x18] sm:$0xf]
    %v67 = vld [vmem:[#allocation2 + $0x1c] sm:$0xf]
    %v68 = vld [vmem:[#allocation2 + $0x20] sm:$0xf]
    %v69 = vld [vmem:[#allocation2 + $0x24] sm:$0xf]
    %v70 = vld [vmem:[#allocation2 + $0x28] sm:$0xf]
    %v71 = vld [vmem:[#allocation2 + $0x2c] sm:$0xf]
    %v72 = vld [vmem:[#allocation2 + $0x30] sm:$0xf]
    %v73 = vld [vmem:[#allocation2 + $0x34] sm:$0xf]
    %v74 = vld [vmem:[#allocation2 + $0x38] sm:$0xf]
    %v75 = vld [vmem:[#allocation2 + $0x3c] sm:$0xf]
    %v76 = vld [vmem:[#allocation2 + $0x40] sm:$0xf]
    %v77 = vld [vmem:[#allocation2 + $0x44] sm:$0xf]
    %v78 = vld [vmem:[#allocation2 + $0x48] sm:$0xf]
    %v79 = vld [vmem:[#allocation2 + $0x4c] sm:$0xf]
    %v80 = vld [vmem:[#allocation2 + $0x50] sm:$0xf]
    %v81 = vld [vmem:[#allocation2 + $0x54] sm:$0xf]
    %v82 = vld [vmem:[#allocation2 + $0x58] sm:$0xf]
    %v83 = vld [vmem:[#allocation2 + $0x5c] sm:$0xf]
    %v84 = vld [vmem:[#allocation2 + $0x60] sm:$0xf]
    %v85 = vld [vmem:[#allocation2 + $0x64] sm:$0xf]
    %v86 = vld [vmem:[#allocation2 + $0x68] sm:$0xf]
    %v87 = vld [vmem:[#allocation2 + $0x6c] sm:$0xf]
    %v88 = vld [vmem:[#allocation2 + $0x70] sm:$0xf]
    %v89 = vld [vmem:[#allocation2 + $0x74] sm:$0xf]
    %v90 = vld [vmem:[#allocation2 + $0x78] sm:$0xf]
    %v91 = vld [vmem:[#allocation2 + $0x7c] sm:$0xf]
    %v92 = vld [vmem:[#allocation2 + $0x80] sm:$0xf]
    %v93 = vld [vmem:[#allocation2 + $0x84] sm:$0xf]
    %v94 = vld [vmem:[#allocation2 + $0x88] sm:$0xf]
    %v95 = vld [vmem:[#allocation2 + $0x8c] sm:$0xf]
    %v96 = vld [vmem:[#allocation2 + $0x90] sm:$0xf]
    %v97 = vld [vmem:[#allocation2 + $0x94] sm:$0xf]
    %v98 = vld [vmem:[#allocation2 + $0x98] sm:$0xf]
    %v99 = vld [vmem:[#allocation2 + $0x9c] sm:$0xf]
    %v100 = vld [vmem:[#allocation2 + $0xa0] sm:$0xf]
    %v101 = vld [vmem:[#allocation2 + $0xa4] sm:$0xf]
    %v102 = vld [vmem:[#allocation2 + $0xa8] sm:$0xf]
    %v103 = vld [vmem:[#allocation2 + $0xac] sm:$0xf]
    %v104 = vld [vmem:[#allocation2 + $0xb0] sm:$0xf]
    %v105 = vld [vmem:[#allocation2 + $0xb4] sm:$0xf]
    %v106 = vld [vmem:[#allocation2 + $0xb8] sm:$0xf]
    %v107 = vld [vmem:[#allocation2 + $0xbc] sm:$0xf]
    %v108 = vld [vmem:[#allocation2 + $0xc0] sm:$0xf]
    %v109 = vld [vmem:[#allocation2 + $0xc4] sm:$0xf]
    %v110 = vld [vmem:[#allocation2 + $0xc8] sm:$0xf]
    %v111 = vld [vmem:[#allocation2 + $0xcc] sm:$0xf]
    %v112 = vld [vmem:[#allocation2 + $0xd0] sm:$0xf]
    %v113 = vld [vmem:[#allocation2 + $0xd4] sm:$0xf]
    %v114 = vld [vmem:[#allocation2 + $0xd8] sm:$0xf]
    %v115 = vld [vmem:[#allocation2 + $0xdc] sm:$0xf]
    %v116 = vld [vmem:[#allocation2 + $0xe0] sm:$0xf]
    %v117 = vld [vmem:[#allocation2 + $0xe4] sm:$0xf]
    %v118 = vld [vmem:[#allocation2 + $0xe8] sm:$0xf]
    %v119 = vld [vmem:[#allocation2 + $0xec] sm:$0xf]
    %v120 = vld [vmem:[#allocation2 + $0xf0] sm:$0xf]
    %v121 = vld [vmem:[#allocation2 + $0xf4] sm:$0xf]
    %v122 = vld [vmem:[#allocation2 + $0xf8] sm:$0xf]
    %v123 = vld [vmem:[#allocation2 + $0xfc] sm:$0xf]
    %v124 = vld [vmem:[#allocation5] sm:$0xf]
    %v125 = vld [vmem:[#allocation5 + $0x4] sm:$0xf]
    %v126 = vld [vmem:[#allocation5 + $0x8] sm:$0xf]
    %v127 = vld [vmem:[#allocation5 + $0xc] sm:$0xf]
    %v128 = vld [vmem:[#allocation5 + $0x10] sm:$0xf]
    %v129 = vld [vmem:[#allocation5 + $0x14] sm:$0xf]
    %v130 = vld [vmem:[#allocation5 + $0x18] sm:$0xf]
    %v131 = vld [vmem:[#allocation5 + $0x1c] sm:$0xf]
    %v132 = vld [vmem:[#allocation5 + $0x20] sm:$0xf]
    %v133 = vld [vmem:[#allocation5 + $0x24] sm:$0xf]
    %v134 = vld [vmem:[#allocation5 + $0x28] sm:$0xf]
    %v135 = vld [vmem:[#allocation5 + $0x2c] sm:$0xf]
    %v136 = vld [vmem:[#allocation5 + $0x30] sm:$0xf]
    %v137 = vld [vmem:[#allocation5 + $0x34] sm:$0xf]
    %v138 = vld [vmem:[#allocation5 + $0x38] sm:$0xf]
    %v139 = vld [vmem:[#allocation5 + $0x3c] sm:$0xf]
    %v140 = vld [vmem:[%s2] sm:$0x1]
    %v142 = vlaneseq
    %v143 = vshrl.u32 %v142, 7
    %v144 = vsub.s32 0, %v143
    %v145 = vrot.slane %v140, %v144
    %v211 = vunpack.c.l.b16 %v60
    %v212 = vunpack.c.l.b16 %v61
    %v213 = vunpack.c.l.b16 %v62
    %v214 = vunpack.c.l.b16 %v63
    %v215 = vunpack.c.l.b16 %v64
    %v216 = vunpack.c.l.b16 %v65
    %v217 = vunpack.c.l.b16 %v66
    %v218 = vunpack.c.l.b16 %v67
    %v219 = vunpack.c.l.b16 %v68
    %v220 = vunpack.c.l.b16 %v69
    %v221 = vunpack.c.l.b16 %v70
    %v222 = vunpack.c.l.b16 %v71
    %v223 = vunpack.c.l.b16 %v72
    %v224 = vunpack.c.l.b16 %v73
    %v225 = vunpack.c.l.b16 %v74
    %v226 = vunpack.c.l.b16 %v75
    %v227 = vunpack.c.l.b16 %v76
    %v228 = vunpack.c.l.b16 %v77
    %v229 = vunpack.c.l.b16 %v78
    %v230 = vunpack.c.l.b16 %v79
    %v231 = vunpack.c.l.b16 %v80
    %v232 = vunpack.c.l.b16 %v81
    %v233 = vunpack.c.l.b16 %v82
    %v234 = vunpack.c.l.b16 %v83
    %v235 = vunpack.c.l.b16 %v84
    %v236 = vunpack.c.l.b16 %v85
    %v237 = vunpack.c.l.b16 %v86
    %v238 = vunpack.c.l.b16 %v87
    %v239 = vunpack.c.l.b16 %v88
    %v240 = vunpack.c.l.b16 %v89
    %v241 = vunpack.c.l.b16 %v90
    %v242 = vunpack.c.l.b16 %v91
    %v243 = vunpack.c.l.b16 %v92
    %v244 = vunpack.c.l.b16 %v93
    %v245 = vunpack.c.l.b16 %v94
    %v246 = vunpack.c.l.b16 %v95
    %v247 = vunpack.c.l.b16 %v96
    %v248 = vunpack.c.l.b16 %v97
    %v249 = vunpack.c.l.b16 %v98
    %v250 = vunpack.c.l.b16 %v99
    %v251 = vunpack.c.l.b16 %v100
    %v252 = vunpack.c.l.b16 %v101
    %v253 = vunpack.c.l.b16 %v102
    %v254 = vunpack.c.l.b16 %v103
    %v255 = vunpack.c.l.b16 %v104
    %v256 = vunpack.c.l.b16 %v105
    %v257 = vunpack.c.l.b16 %v106
    %v258 = vunpack.c.l.b16 %v107
    %v259 = vunpack.c.l.b16 %v108
    %v260 = vunpack.c.l.b16 %v109
    %v261 = vunpack.c.l.b16 %v110
    %v262 = vunpack.c.l.b16 %v111
    %v263 = vunpack.c.l.b16 %v112
    %v264 = vunpack.c.l.b16 %v113
    %v265 = vunpack.c.l.b16 %v114
    %v266 = vunpack.c.l.b16 %v115
    %v267 = vunpack.c.l.b16 %v116
    %v268 = vunpack.c.l.b16 %v117
    %v269 = vunpack.c.l.b16 %v118
    %v270 = vunpack.c.l.b16 %v119
    %v271 = vunpack.c.l.b16 %v120
    %v272 = vunpack.c.l.b16 %v121
    %v273 = vunpack.c.l.b16 %v122
    %v274 = vunpack.c.l.b16 %v123
    %v275 = vpack.c.b16 %v212, %v211
    %v276 = vpack.c.b16 %v214, %v213
    %v277 = vpack.c.b16 %v216, %v215
    %v278 = vpack.c.b16 %v218, %v217
    %v279 = vpack.c.b16 %v220, %v219
    %v280 = vpack.c.b16 %v222, %v221
    %v281 = vpack.c.b16 %v224, %v223
    %v282 = vpack.c.b16 %v226, %v225
    %v283 = vpack.c.b16 %v228, %v227
    %v284 = vpack.c.b16 %v230, %v229
    %v285 = vpack.c.b16 %v232, %v231
    %v286 = vpack.c.b16 %v234, %v233
    %v287 = vpack.c.b16 %v236, %v235
    %v288 = vpack.c.b16 %v238, %v237
    %v289 = vpack.c.b16 %v240, %v239
    %v290 = vpack.c.b16 %v242, %v241
    %v291 = vpack.c.b16 %v244, %v243
    %v292 = vpack.c.b16 %v246, %v245
    %v293 = vpack.c.b16 %v248, %v247
    %v294 = vpack.c.b16 %v250, %v249
    %v295 = vpack.c.b16 %v252, %v251
    %v296 = vpack.c.b16 %v254, %v253
    %v297 = vpack.c.b16 %v256, %v255
    %v298 = vpack.c.b16 %v258, %v257
    %v299 = vpack.c.b16 %v260, %v259
    %v300 = vpack.c.b16 %v262, %v261
    %v301 = vpack.c.b16 %v264, %v263
    %v302 = vpack.c.b16 %v266, %v265
    %v303 = vpack.c.b16 %v268, %v267
    %v304 = vpack.c.b16 %v270, %v269
    %v305 = vpack.c.b16 %v272, %v271
    %v306 = vpack.c.b16 %v274, %v273
    %v355 = vunpack.c.l.b16 %v124
    %v356 = vunpack.c.l.b16 %v125
    %v357 = vunpack.c.l.b16 %v126
    %v358 = vunpack.c.l.b16 %v127
    %v359 = vunpack.c.l.b16 %v128
    %v360 = vunpack.c.l.b16 %v129
    %v361 = vunpack.c.l.b16 %v130
    %v362 = vunpack.c.l.b16 %v131
    %v363 = vunpack.c.l.b16 %v132
    %v364 = vunpack.c.l.b16 %v133
    %v365 = vunpack.c.l.b16 %v134
    %v366 = vunpack.c.l.b16 %v135
    %v367 = vunpack.c.l.b16 %v136
    %v368 = vunpack.c.l.b16 %v137
    %v369 = vunpack.c.l.b16 %v138
    %v370 = vunpack.c.l.b16 %v139
    %v371 = vpack.c.b16 %v356, %v355
    %v372 = vpack.c.b16 %v358, %v357
    %v373 = vpack.c.b16 %v360, %v359
    %v374 = vpack.c.b16 %v362, %v361
    %v375 = vpack.c.b16 %v364, %v363
    %v376 = vpack.c.b16 %v366, %v365
    %v377 = vpack.c.b16 %v368, %v367
    %v378 = vpack.c.b16 %v370, %v369
    %387 = vmatprep.subr.bf16.mxu0 0
    %388 = vmatpush1.bf16.msra.mxu0 %v371
    %389 = vmatprep.subr.bf16.mxu0 0
    %390 = vmatpush1.bf16.msra.mxu0 %v372
    %391 = vmatprep.subr.bf16.mxu0 0
    %392 = vmatpush1.bf16.msra.mxu0 %v373
    %393 = vmatprep.subr.bf16.mxu0 0
    %394 = vmatpush1.bf16.msra.mxu0 %v374
    %395 = vmatprep.subr.bf16.mxu0 0
    %396 = vmatpush1.bf16.msra.mxu0 %v375
    %397 = vmatprep.subr.bf16.mxu0 0
    %398 = vmatpush1.bf16.msra.mxu0 %v376
    %399 = vmatprep.subr.bf16.mxu0 0
    %400 = vmatpush1.bf16.msra.mxu0 %v377
    %401 = vmatprep.subr.bf16.mxu0 0
    %402 = vmatpush1.bf16.msra.mxu0 %v378
    %403 = vmatprep.subr.bf16.mxu0 0
    %404 = vmatpush1.bf16.msra.mxu0 0
    %405 = vmatprep.subr.bf16.mxu0 0
    %406 = vmatpush1.bf16.msra.mxu0 0
    %407 = vmatprep.subr.bf16.mxu0 0
    %408 = vmatpush1.bf16.msra.mxu0 0
    %409 = vmatprep.subr.bf16.mxu0 0
    %410 = vmatpush1.bf16.msra.mxu0 0
    %411 = vmatprep.subr.bf16.mxu0 0
    %412 = vmatpush1.bf16.msra.mxu0 0
    %413 = vmatprep.subr.bf16.mxu0 0
    %414 = vmatpush1.bf16.msra.mxu0 0
    %415 = vmatprep.subr.bf16.mxu0 0
    %416 = vmatpush1.bf16.msra.mxu0 0
    %417 = vmatprep.subr.bf16.mxu0 0
    %418 = vmatpush1.bf16.msra.mxu0 0
    %419 = vmatprep.mubr.bf16.mxu0 0
    %420 = vmatmul.mubr.bf16.gmra.mrb[0].mxu0 %v275
    %v421 = vpop.f32.mrb[0].mxu0
    %v422 = vadd.f32 %v145, %v421
    %v423 = vpop.f32.mrb[0].mxu0
    %v424 = vpop.f32.mrb[0].mxu0
    %v425 = vadd.f32 %v145, %v424
    %v426 = vpop.f32.mrb[0].mxu0
    %427 = vmatprep.mubr.bf16.mxu0 0
    %428 = vmatmul.mubr.bf16.gmra.mrb[0].mxu0 %v276
    %v429 = vpop.f32.mrb[0].mxu0
    %v430 = vadd.f32 %v145, %v429
    %v431 = vpop.f32.mrb[0].mxu0
    %v432 = vpop.f32.mrb[0].mxu0
    %v433 = vadd.f32 %v145, %v432
    %v434 = vpop.f32.mrb[0].mxu0
    %435 = vmatprep.mubr.bf16.mxu0 0
    %436 = vmatmul.mubr.bf16.gmra.mrb[0].mxu0 %v277
    %v437 = vpop.f32.mrb[0].mxu0
    %v438 = vadd.f32 %v145, %v437
    %v439 = vpop.f32.mrb[0].mxu0
    %v440 = vpop.f32.mrb[0].mxu0
    %v441 = vadd.f32 %v145, %v440
    %v442 = vpop.f32.mrb[0].mxu0
    %443 = vmatprep.mubr.bf16.mxu0 0
    %444 = vmatmul.mubr.bf16.gmra.mrb[0].mxu0 %v278
    %v445 = vpop.f32.mrb[0].mxu0
    %v446 = vadd.f32 %v145, %v445
    %v447 = vpop.f32.mrb[0].mxu0
    %v448 = vpop.f32.mrb[0].mxu0
    %v449 = vadd.f32 %v145, %v448
    %v450 = vpop.f32.mrb[0].mxu0
    %451 = vmatprep.mubr.bf16.mxu0 0
    %452 = vmatmul.mubr.bf16.gmra.mrb[0].mxu0 %v279
    %v453 = vpop.f32.mrb[0].mxu0
    %v454 = vadd.f32 %v145, %v453
    %v455 = vpop.f32.mrb[0].mxu0
    %v456 = vpop.f32.mrb[0].mxu0
    %v457 = vadd.f32 %v145, %v456
    %v458 = vpop.f32.mrb[0].mxu0
    %459 = vmatprep.mubr.bf16.mxu0 0
    %460 = vmatmul.mubr.bf16.gmra.mrb[0].mxu0 %v280
    %v461 = vpop.f32.mrb[0].mxu0
    %v462 = vadd.f32 %v145, %v461
    %v463 = vpop.f32.mrb[0].mxu0
    %v464 = vpop.f32.mrb[0].mxu0
    %v465 = vadd.f32 %v145, %v464
    %v466 = vpop.f32.mrb[0].mxu0
    %467 = vmatprep.mubr.bf16.mxu0 0
    %468 = vmatmul.mubr.bf16.gmra.mrb[0].mxu0 %v281
    %v469 = vpop.f32.mrb[0].mxu0
    %v470 = vadd.f32 %v145, %v469
    %v471 = vpop.f32.mrb[0].mxu0
    %v472 = vpop.f32.mrb[0].mxu0
    %v473 = vadd.f32 %v145, %v472
    %v474 = vpop.f32.mrb[0].mxu0
    %475 = vmatprep.mubr.bf16.mxu0 0
    %476 = vmatmul.mubr.bf16.gmra.mrb[0].mxu0 %v282
    %v477 = vpop.f32.mrb[0].mxu0
    %v478 = vadd.f32 %v145, %v477
    %v479 = vpop.f32.mrb[0].mxu0
    %v480 = vpop.f32.mrb[0].mxu0
    %v481 = vadd.f32 %v145, %v480
    %v482 = vpop.f32.mrb[0].mxu0
    %483 = vmatprep.mubr.bf16.mxu0 0
    %484 = vmatmul.mubr.bf16.gmra.mrb[0].mxu0 %v283
    %v485 = vpop.f32.mrb[0].mxu0
    %v486 = vadd.f32 %v145, %v485
    %v487 = vpop.f32.mrb[0].mxu0
    %v488 = vpop.f32.mrb[0].mxu0
    %v489 = vadd.f32 %v145, %v488
    %v490 = vpop.f32.mrb[0].mxu0
    %491 = vmatprep.mubr.bf16.mxu0 0
    %492 = vmatmul.mubr.bf16.gmra.mrb[0].mxu0 %v284
    %v493 = vpop.f32.mrb[0].mxu0
    %v494 = vadd.f32 %v145, %v493
    %v495 = vpop.f32.mrb[0].mxu0
    %v496 = vpop.f32.mrb[0].mxu0
    %v497 = vadd.f32 %v145, %v496
    %v498 = vpop.f32.mrb[0].mxu0
    %499 = vmatprep.mubr.bf16.mxu0 0
    %500 = vmatmul.mubr.bf16.gmra.mrb[0].mxu0 %v285
    %v501 = vpop.f32.mrb[0].mxu0
    %v502 = vadd.f32 %v145, %v501
    %v503 = vpop.f32.mrb[0].mxu0
    %v504 = vpop.f32.mrb[0].mxu0
    %v505 = vadd.f32 %v145, %v504
    %v506 = vpop.f32.mrb[0].mxu0
    %507 = vmatprep.mubr.bf16.mxu0 0
    %508 = vmatmul.mubr.bf16.gmra.mrb[0].mxu0 %v286
    %v509 = vpop.f32.mrb[0].mxu0
    %v510 = vadd.f32 %v145, %v509
    %v511 = vpop.f32.mrb[0].mxu0
    %v512 = vpop.f32.mrb[0].mxu0
    %v513 = vadd.f32 %v145, %v512
    %v514 = vpop.f32.mrb[0].mxu0
    %515 = vmatprep.mubr.bf16.mxu0 0
    %516 = vmatmul.mubr.bf16.gmra.mrb[0].mxu0 %v287
    %v517 = vpop.f32.mrb[0].mxu0
    %v518 = vadd.f32 %v145, %v517
    %v519 = vpop.f32.mrb[0].mxu0
    %v520 = vpop.f32.mrb[0].mxu0
    %v521 = vadd.f32 %v145, %v520
    %v522 = vpop.f32.mrb[0].mxu0
    %523 = vmatprep.mubr.bf16.mxu0 0
    %524 = vmatmul.mubr.bf16.gmra.mrb[0].mxu0 %v288
    %v525 = vpop.f32.mrb[0].mxu0
    %v526 = vadd.f32 %v145, %v525
    %v527 = vpop.f32.mrb[0].mxu0
    %v528 = vpop.f32.mrb[0].mxu0
    %v529 = vadd.f32 %v145, %v528
    %v530 = vpop.f32.mrb[0].mxu0
    %531 = vmatprep.mubr.bf16.mxu0 0
    %532 = vmatmul.mubr.bf16.gmra.mrb[0].mxu0 %v289
    %v533 = vpop.f32.mrb[0].mxu0
    %v534 = vadd.f32 %v145, %v533
    %v535 = vpop.f32.mrb[0].mxu0
    %v536 = vpop.f32.mrb[0].mxu0
    %v537 = vadd.f32 %v145, %v536
    %v538 = vpop.f32.mrb[0].mxu0
    %539 = vmatprep.mubr.bf16.mxu0 0
    %540 = vmatmul.mubr.bf16.gmra.mrb[0].mxu0 %v290
    %v541 = vpop.f32.mrb[0].mxu0
    %v542 = vadd.f32 %v145, %v541
    %v543 = vpop.f32.mrb[0].mxu0
    %v544 = vpop.f32.mrb[0].mxu0
    %v545 = vadd.f32 %v145, %v544
    %v546 = vpop.f32.mrb[0].mxu0
    %547 = vmatprep.mubr.bf16.mxu0 0
    %548 = vmatmul.mubr.bf16.gmra.mrb[0].mxu0 %v291
    %v549 = vpop.f32.mrb[0].mxu0
    %v550 = vadd.f32 %v145, %v549
    %v551 = vpop.f32.mrb[0].mxu0
    %v552 = vpop.f32.mrb[0].mxu0
    %v553 = vadd.f32 %v145, %v552
    %v554 = vpop.f32.mrb[0].mxu0
    %555 = vmatprep.mubr.bf16.mxu0 0
    %556 = vmatmul.mubr.bf16.gmra.mrb[0].mxu0 %v292
    %v557 = vpop.f32.mrb[0].mxu0
    %v558 = vadd.f32 %v145, %v557
    %v559 = vpop.f32.mrb[0].mxu0
    %v560 = vpop.f32.mrb[0].mxu0
    %v561 = vadd.f32 %v145, %v560
    %v562 = vpop.f32.mrb[0].mxu0
    %563 = vmatprep.mubr.bf16.mxu0 0
    %564 = vmatmul.mubr.bf16.gmra.mrb[0].mxu0 %v293
    %v565 = vpop.f32.mrb[0].mxu0
    %v566 = vadd.f32 %v145, %v565
    %v567 = vpop.f32.mrb[0].mxu0
    %v568 = vpop.f32.mrb[0].mxu0
    %v569 = vadd.f32 %v145, %v568
    %v570 = vpop.f32.mrb[0].mxu0
    %571 = vmatprep.mubr.bf16.mxu0 0
    %572 = vmatmul.mubr.bf16.gmra.mrb[0].mxu0 %v294
    %v573 = vpop.f32.mrb[0].mxu0
    %v574 = vadd.f32 %v145, %v573
    %v575 = vpop.f32.mrb[0].mxu0
    %v576 = vpop.f32.mrb[0].mxu0
    %v577 = vadd.f32 %v145, %v576
    %v578 = vpop.f32.mrb[0].mxu0
    %579 = vmatprep.mubr.bf16.mxu0 0
    %580 = vmatmul.mubr.bf16.gmra.mrb[0].mxu0 %v295
    %v581 = vpop.f32.mrb[0].mxu0
    %v582 = vadd.f32 %v145, %v581
    %v583 = vpop.f32.mrb[0].mxu0
    %v584 = vpop.f32.mrb[0].mxu0
    %v585 = vadd.f32 %v145, %v584
    %v586 = vpop.f32.mrb[0].mxu0
    %587 = vmatprep.mubr.bf16.mxu0 0
    %588 = vmatmul.mubr.bf16.gmra.mrb[0].mxu0 %v296
    %v589 = vpop.f32.mrb[0].mxu0
    %v590 = vadd.f32 %v145, %v589
    %v591 = vpop.f32.mrb[0].mxu0
    %v592 = vpop.f32.mrb[0].mxu0
    %v593 = vadd.f32 %v145, %v592
    %v594 = vpop.f32.mrb[0].mxu0
    %595 = vmatprep.mubr.bf16.mxu0 0
    %596 = vmatmul.mubr.bf16.gmra.mrb[0].mxu0 %v297
    %v597 = vpop.f32.mrb[0].mxu0
    %v598 = vadd.f32 %v145, %v597
    %v599 = vpop.f32.mrb[0].mxu0
    %v600 = vpop.f32.mrb[0].mxu0
    %v601 = vadd.f32 %v145, %v600
    %v602 = vpop.f32.mrb[0].mxu0
    %603 = vmatprep.mubr.bf16.mxu0 0
    %604 = vmatmul.mubr.bf16.gmra.mrb[0].mxu0 %v298
    %v605 = vpop.f32.mrb[0].mxu0
    %v606 = vadd.f32 %v145, %v605
    %v607 = vpop.f32.mrb[0].mxu0
    %v608 = vpop.f32.mrb[0].mxu0
    %v609 = vadd.f32 %v145, %v608
    %v610 = vpop.f32.mrb[0].mxu0
    %611 = vmatprep.mubr.bf16.mxu0 0
    %612 = vmatmul.mubr.bf16.gmra.mrb[0].mxu0 %v299
    %v613 = vpop.f32.mrb[0].mxu0
    %v614 = vadd.f32 %v145, %v613
    %v615 = vpop.f32.mrb[0].mxu0
    %v616 = vpop.f32.mrb[0].mxu0
    %v617 = vadd.f32 %v145, %v616
    %v618 = vpop.f32.mrb[0].mxu0
    %619 = vmatprep.mubr.bf16.mxu0 0
    %620 = vmatmul.mubr.bf16.gmra.mrb[0].mxu0 %v300
    %v621 = vpop.f32.mrb[0].mxu0
    %v622 = vadd.f32 %v145, %v621
    %v623 = vpop.f32.mrb[0].mxu0
    %v624 = vpop.f32.mrb[0].mxu0
    %v625 = vadd.f32 %v145, %v624
    %v626 = vpop.f32.mrb[0].mxu0
    %627 = vmatprep.mubr.bf16.mxu0 0
    %628 = vmatmul.mubr.bf16.gmra.mrb[0].mxu0 %v301
    %v629 = vpop.f32.mrb[0].mxu0
    %v630 = vadd.f32 %v145, %v629
    %v631 = vpop.f32.mrb[0].mxu0
    %v632 = vpop.f32.mrb[0].mxu0
    %v633 = vadd.f32 %v145, %v632
    %v634 = vpop.f32.mrb[0].mxu0
    %635 = vmatprep.mubr.bf16.mxu0 0
    %636 = vmatmul.mubr.bf16.gmra.mrb[0].mxu0 %v302
    %v637 = vpop.f32.mrb[0].mxu0
    %v638 = vadd.f32 %v145, %v637
    %v639 = vpop.f32.mrb[0].mxu0
    %v640 = vpop.f32.mrb[0].mxu0
    %v641 = vadd.f32 %v145, %v640
    %v642 = vpop.f32.mrb[0].mxu0
    %643 = vmatprep.mubr.bf16.mxu0 0
    %644 = vmatmul.mubr.bf16.gmra.mrb[0].mxu0 %v303
    %v645 = vpop.f32.mrb[0].mxu0
    %v646 = vadd.f32 %v145, %v645
    %v647 = vpop.f32.mrb[0].mxu0
    %v648 = vpop.f32.mrb[0].mxu0
    %v649 = vadd.f32 %v145, %v648
    %v650 = vpop.f32.mrb[0].mxu0
    %651 = vmatprep.mubr.bf16.mxu0 0
    %652 = vmatmul.mubr.bf16.gmra.mrb[0].mxu0 %v304
    %v653 = vpop.f32.mrb[0].mxu0
    %v654 = vadd.f32 %v145, %v653
    %v655 = vpop.f32.mrb[0].mxu0
    %v656 = vpop.f32.mrb[0].mxu0
    %v657 = vadd.f32 %v145, %v656
    %v658 = vpop.f32.mrb[0].mxu0
    %659 = vmatprep.mubr.bf16.mxu0 0
    %660 = vmatmul.mubr.bf16.gmra.mrb[0].mxu0 %v305
    %v661 = vpop.f32.mrb[0].mxu0
    %v662 = vadd.f32 %v145, %v661
    %v663 = vpop.f32.mrb[0].mxu0
    %v664 = vpop.f32.mrb[0].mxu0
    %v665 = vadd.f32 %v145, %v664
    %v666 = vpop.f32.mrb[0].mxu0
    %667 = vmatprep.mubr.bf16.mxu0 0
    %668 = vmatmul.mubr.bf16.gmra.mrb[0].mxu0 %v306
    %v669 = vpop.f32.mrb[0].mxu0
    %v670 = vadd.f32 %v145, %v669
    %v671 = vpop.f32.mrb[0].mxu0
    %v672 = vpop.f32.mrb[0].mxu0
    %v673 = vadd.f32 %v145, %v672
    %v674 = vpop.f32.mrb[0].mxu0
    %675 = vdwg.mxu0
    %v676 = vmul.f32 %v422, 0.1
    %v677 = vmul.f32 %v425, 0.1
    %v678 = vmul.f32 %v430, 0.1
    %v679 = vmul.f32 %v433, 0.1
    %v680 = vmul.f32 %v438, 0.1
    %v681 = vmul.f32 %v441, 0.1
    %v682 = vmul.f32 %v446, 0.1
    %v683 = vmul.f32 %v449, 0.1
    %v684 = vmul.f32 %v454, 0.1
    %v685 = vmul.f32 %v457, 0.1
    %v686 = vmul.f32 %v462, 0.1
    %v687 = vmul.f32 %v465, 0.1
    %v688 = vmul.f32 %v470, 0.1
    %v689 = vmul.f32 %v473, 0.1
    %v690 = vmul.f32 %v478, 0.1
    %v691 = vmul.f32 %v481, 0.1
    %v692 = vmul.f32 %v486, 0.1
    %v693 = vmul.f32 %v489, 0.1
    %v694 = vmul.f32 %v494, 0.1
    %v695 = vmul.f32 %v497, 0.1
    %v696 = vmul.f32 %v502, 0.1
    %v697 = vmul.f32 %v505, 0.1
    %v698 = vmul.f32 %v510, 0.1
    %v699 = vmul.f32 %v513, 0.1
    %v700 = vmul.f32 %v518, 0.1
    %v701 = vmul.f32 %v521, 0.1
    %v702 = vmul.f32 %v526, 0.1
    %v703 = vmul.f32 %v529, 0.1
    %v704 = vmul.f32 %v534, 0.1
    %v705 = vmul.f32 %v537, 0.1
    %v706 = vmul.f32 %v542, 0.1
    %v707 = vmul.f32 %v545, 0.1
    %v708 = vmul.f32 %v550, 0.1
    %v709 = vmul.f32 %v553, 0.1
    %v710 = vmul.f32 %v558, 0.1
    %v711 = vmul.f32 %v561, 0.1
    %v712 = vmul.f32 %v566, 0.1
    %v713 = vmul.f32 %v569, 0.1
    %v714 = vmul.f32 %v574, 0.1
    %v715 = vmul.f32 %v577, 0.1
    %v716 = vmul.f32 %v582, 0.1
    %v717 = vmul.f32 %v585, 0.1
    %v718 = vmul.f32 %v590, 0.1
    %v719 = vmul.f32 %v593, 0.1
    %v720 = vmul.f32 %v598, 0.1
    %v721 = vmul.f32 %v601, 0.1
    %v722 = vmul.f32 %v606, 0.1
    %v723 = vmul.f32 %v609, 0.1
    %v724 = vmul.f32 %v614, 0.1
    %v725 = vmul.f32 %v617, 0.1
    %v726 = vmul.f32 %v622, 0.1
    %v727 = vmul.f32 %v625, 0.1
    %v728 = vmul.f32 %v630, 0.1
    %v729 = vmul.f32 %v633, 0.1
    %v730 = vmul.f32 %v638, 0.1
    %v731 = vmul.f32 %v641, 0.1
    %v732 = vmul.f32 %v646, 0.1
    %v733 = vmul.f32 %v649, 0.1
    %v734 = vmul.f32 %v654, 0.1
    %v735 = vmul.f32 %v657, 0.1
    %v736 = vmul.f32 %v662, 0.1
    %v737 = vmul.f32 %v665, 0.1
    %v738 = vmul.f32 %v670, 0.1
    %v739 = vmul.f32 %v673, 0.1
    %v740 = vld [vmem:[#allocation7] sm:$0xff]
    %v741 = vld [vmem:[#allocation7 + $0x8] sm:$0xff]
    %v742 = vld [vmem:[#allocation7 + $0x10] sm:$0xff]
    %v743 = vld [vmem:[#allocation7 + $0x18] sm:$0xff]
    %v744 = vld [vmem:[#allocation7 + $0x20] sm:$0xff]
    %v745 = vld [vmem:[#allocation7 + $0x28] sm:$0xff]
    %v746 = vld [vmem:[#allocation7 + $0x30] sm:$0xff]
    %v747 = vld [vmem:[#allocation7 + $0x38] sm:$0xff]
    %v748 = vld [vmem:[#allocation7 + $0x40] sm:$0xff]
    %v749 = vld [vmem:[#allocation7 + $0x48] sm:$0xff]
    %v750 = vld [vmem:[#allocation7 + $0x50] sm:$0xff]
    %v751 = vld [vmem:[#allocation7 + $0x58] sm:$0xff]
    %v752 = vld [vmem:[#allocation7 + $0x60] sm:$0xff]
    %v753 = vld [vmem:[#allocation7 + $0x68] sm:$0xff]
    %v754 = vld [vmem:[#allocation7 + $0x70] sm:$0xff]
    %v755 = vld [vmem:[#allocation7 + $0x78] sm:$0xff]
    %v756 = vld [vmem:[#allocation7 + $0x80] sm:$0xff]
    %v757 = vld [vmem:[#allocation7 + $0x88] sm:$0xff]
    %v758 = vld [vmem:[#allocation7 + $0x90] sm:$0xff]
    %v759 = vld [vmem:[#allocation7 + $0x98] sm:$0xff]
    %v760 = vld [vmem:[#allocation7 + $0xa0] sm:$0xff]
    %v761 = vld [vmem:[#allocation7 + $0xa8] sm:$0xff]
    %v762 = vld [vmem:[#allocation7 + $0xb0] sm:$0xff]
    %v763 = vld [vmem:[#allocation7 + $0xb8] sm:$0xff]
    %v764 = vld [vmem:[#allocation7 + $0xc0] sm:$0xff]
    %v765 = vld [vmem:[#allocation7 + $0xc8] sm:$0xff]
    %v766 = vld [vmem:[#allocation7 + $0xd0] sm:$0xff]
    %v767 = vld [vmem:[#allocation7 + $0xd8] sm:$0xff]
    %v768 = vld [vmem:[#allocation7 + $0xe0] sm:$0xff]
    %v769 = vld [vmem:[#allocation7 + $0xe8] sm:$0xff]
    %v770 = vld [vmem:[#allocation7 + $0xf0] sm:$0xff]
    %v771 = vld [vmem:[#allocation7 + $0xf8] sm:$0xff]
    %v772 = vld [vmem:[#allocation7 + $0x100] sm:$0xff]
    %v773 = vld [vmem:[#allocation7 + $0x108] sm:$0xff]
    %v774 = vld [vmem:[#allocation7 + $0x110] sm:$0xff]
    %v775 = vld [vmem:[#allocation7 + $0x118] sm:$0xff]
    %v776 = vld [vmem:[#allocation7 + $0x120] sm:$0xff]
    %v777 = vld [vmem:[#allocation7 + $0x128] sm:$0xff]
    %v778 = vld [vmem:[#allocation7 + $0x130] sm:$0xff]
    %v779 = vld [vmem:[#allocation7 + $0x138] sm:$0xff]
    %v780 = vld [vmem:[#allocation7 + $0x140] sm:$0xff]
    %v781 = vld [vmem:[#allocation7 + $0x148] sm:$0xff]
    %v782 = vld [vmem:[#allocation7 + $0x150] sm:$0xff]
    %v783 = vld [vmem:[#allocation7 + $0x158] sm:$0xff]
    %v784 = vld [vmem:[#allocation7 + $0x160] sm:$0xff]
    %v785 = vld [vmem:[#allocation7 + $0x168] sm:$0xff]
    %v786 = vld [vmem:[#allocation7 + $0x170] sm:$0xff]
    %v787 = vld [vmem:[#allocation7 + $0x178] sm:$0xff]
    %v788 = vld [vmem:[#allocation7 + $0x180] sm:$0xff]
    %v789 = vld [vmem:[#allocation7 + $0x188] sm:$0xff]
    %v790 = vld [vmem:[#allocation7 + $0x190] sm:$0xff]
    %v791 = vld [vmem:[#allocation7 + $0x198] sm:$0xff]
    %v792 = vld [vmem:[#allocation7 + $0x1a0] sm:$0xff]
    %v793 = vld [vmem:[#allocation7 + $0x1a8] sm:$0xff]
    %v794 = vld [vmem:[#allocation7 + $0x1b0] sm:$0xff]
    %v795 = vld [vmem:[#allocation7 + $0x1b8] sm:$0xff]
    %v796 = vld [vmem:[#allocation7 + $0x1c0] sm:$0xff]
    %v797 = vld [vmem:[#allocation7 + $0x1c8] sm:$0xff]
    %v798 = vld [vmem:[#allocation7 + $0x1d0] sm:$0xff]
    %v799 = vld [vmem:[#allocation7 + $0x1d8] sm:$0xff]
    %v800 = vld [vmem:[#allocation7 + $0x1e0] sm:$0xff]
    %v801 = vld [vmem:[#allocation7 + $0x1e8] sm:$0xff]
    %v802 = vld [vmem:[#allocation7 + $0x1f0] sm:$0xff]
    %v803 = vld [vmem:[#allocation7 + $0x1f8] sm:$0xff]
    %v804 = vld [vmem:[#allocation7 + $0x200] sm:$0xff]
    %v805 = vld [vmem:[#allocation7 + $0x208] sm:$0xff]
    %v806 = vld [vmem:[#allocation7 + $0x210] sm:$0xff]
    %v807 = vld [vmem:[#allocation7 + $0x218] sm:$0xff]
    %v808 = vld [vmem:[#allocation7 + $0x220] sm:$0xff]
    %v809 = vld [vmem:[#allocation7 + $0x228] sm:$0xff]
    %v810 = vld [vmem:[#allocation7 + $0x230] sm:$0xff]
    %v811 = vld [vmem:[#allocation7 + $0x238] sm:$0xff]
    %v812 = vld [vmem:[#allocation7 + $0x240] sm:$0xff]
    %v813 = vld [vmem:[#allocation7 + $0x248] sm:$0xff]
    %v814 = vld [vmem:[#allocation7 + $0x250] sm:$0xff]
    %v815 = vld [vmem:[#allocation7 + $0x258] sm:$0xff]
    %v816 = vld [vmem:[#allocation7 + $0x260] sm:$0xff]
    %v817 = vld [vmem:[#allocation7 + $0x268] sm:$0xff]
    %v818 = vld [vmem:[#allocation7 + $0x270] sm:$0xff]
    %v819 = vld [vmem:[#allocation7 + $0x278] sm:$0xff]
    %v820 = vld [vmem:[#allocation7 + $0x280] sm:$0xff]
    %v821 = vld [vmem:[#allocation7 + $0x288] sm:$0xff]
    %v822 = vld [vmem:[#allocation7 + $0x290] sm:$0xff]
    %v823 = vld [vmem:[#allocation7 + $0x298] sm:$0xff]
    %v824 = vld [vmem:[#allocation7 + $0x2a0] sm:$0xff]
    %v825 = vld [vmem:[#allocation7 + $0x2a8] sm:$0xff]
    %v826 = vld [vmem:[#allocation7 + $0x2b0] sm:$0xff]
    %v827 = vld [vmem:[#allocation7 + $0x2b8] sm:$0xff]
    %v828 = vld [vmem:[#allocation7 + $0x2c0] sm:$0xff]
    %v829 = vld [vmem:[#allocation7 + $0x2c8] sm:$0xff]
    %v830 = vld [vmem:[#allocation7 + $0x2d0] sm:$0xff]
    %v831 = vld [vmem:[#allocation7 + $0x2d8] sm:$0xff]
    %v832 = vld [vmem:[#allocation7 + $0x2e0] sm:$0xff]
    %v833 = vld [vmem:[#allocation7 + $0x2e8] sm:$0xff]
    %v834 = vld [vmem:[#allocation7 + $0x2f0] sm:$0xff]
    %v835 = vld [vmem:[#allocation7 + $0x2f8] sm:$0xff]
    %v836 = vld [vmem:[#allocation7 + $0x300] sm:$0xff]
    %v837 = vld [vmem:[#allocation7 + $0x308] sm:$0xff]
    %v838 = vld [vmem:[#allocation7 + $0x310] sm:$0xff]
    %v839 = vld [vmem:[#allocation7 + $0x318] sm:$0xff]
    %v840 = vld [vmem:[#allocation7 + $0x320] sm:$0xff]
    %v841 = vld [vmem:[#allocation7 + $0x328] sm:$0xff]
    %v842 = vld [vmem:[#allocation7 + $0x330] sm:$0xff]
    %v843 = vld [vmem:[#allocation7 + $0x338] sm:$0xff]
    %v844 = vld [vmem:[#allocation7 + $0x340] sm:$0xff]
    %v845 = vld [vmem:[#allocation7 + $0x348] sm:$0xff]
    %v846 = vld [vmem:[#allocation7 + $0x350] sm:$0xff]
    %v847 = vld [vmem:[#allocation7 + $0x358] sm:$0xff]
    %v848 = vld [vmem:[#allocation7 + $0x360] sm:$0xff]
    %v849 = vld [vmem:[#allocation7 + $0x368] sm:$0xff]
    %v850 = vld [vmem:[#allocation7 + $0x370] sm:$0xff]
    %v851 = vld [vmem:[#allocation7 + $0x378] sm:$0xff]
    %v852 = vld [vmem:[#allocation7 + $0x380] sm:$0xff]
    %v853 = vld [vmem:[#allocation7 + $0x388] sm:$0xff]
    %v854 = vld [vmem:[#allocation7 + $0x390] sm:$0xff]
    %v855 = vld [vmem:[#allocation7 + $0x398] sm:$0xff]
    %v856 = vld [vmem:[#allocation7 + $0x3a0] sm:$0xff]
    %v857 = vld [vmem:[#allocation7 + $0x3a8] sm:$0xff]
    %v858 = vld [vmem:[#allocation7 + $0x3b0] sm:$0xff]
    %v859 = vld [vmem:[#allocation7 + $0x3b8] sm:$0xff]
    %v860 = vld [vmem:[#allocation7 + $0x3c0] sm:$0xff]
    %v861 = vld [vmem:[#allocation7 + $0x3c8] sm:$0xff]
    %v862 = vld [vmem:[#allocation7 + $0x3d0] sm:$0xff]
    %v863 = vld [vmem:[#allocation7 + $0x3d8] sm:$0xff]
    %v864 = vld [vmem:[#allocation7 + $0x3e0] sm:$0xff]
    %v865 = vld [vmem:[#allocation7 + $0x3e8] sm:$0xff]
    %v866 = vld [vmem:[#allocation7 + $0x3f0] sm:$0xff]
    %v867 = vld [vmem:[#allocation7 + $0x3f8] sm:$0xff]
    %v868 = vpack.c.bf16 %v425, %v422
    %v869 = vpack.c.bf16 %v433, %v430
    %v870 = vpack.c.bf16 %v441, %v438
    %v871 = vpack.c.bf16 %v449, %v446
    %v872 = vpack.c.bf16 %v457, %v454
    %v873 = vpack.c.bf16 %v465, %v462
    %v874 = vpack.c.bf16 %v473, %v470
    %v875 = vpack.c.bf16 %v481, %v478
    %v876 = vpack.c.bf16 %v489, %v486
    %v877 = vpack.c.bf16 %v497, %v494
    %v878 = vpack.c.bf16 %v505, %v502
    %v879 = vpack.c.bf16 %v513, %v510
    %v880 = vpack.c.bf16 %v521, %v518
    %v881 = vpack.c.bf16 %v529, %v526
    %v882 = vpack.c.bf16 %v537, %v534
    %v883 = vpack.c.bf16 %v545, %v542
    %v884 = vpack.c.bf16 %v553, %v550
    %v885 = vpack.c.bf16 %v561, %v558
    %v886 = vpack.c.bf16 %v569, %v566
    %v887 = vpack.c.bf16 %v577, %v574
    %v888 = vpack.c.bf16 %v585, %v582
    %v889 = vpack.c.bf16 %v593, %v590
    %v890 = vpack.c.bf16 %v601, %v598
    %v891 = vpack.c.bf16 %v609, %v606
    %v892 = vpack.c.bf16 %v617, %v614
    %v893 = vpack.c.bf16 %v625, %v622
    %v894 = vpack.c.bf16 %v633, %v630
    %v895 = vpack.c.bf16 %v641, %v638
    %v896 = vpack.c.bf16 %v649, %v646
    %v897 = vpack.c.bf16 %v657, %v654
    %v898 = vpack.c.bf16 %v665, %v662
    %v899 = vpack.c.bf16 %v673, %v670
    %v1028 = vunpack.c.l.b16 %v740
    %v1029 = vunpack.c.h.b16 %v740
    %v1030 = vunpack.c.l.b16 %v741
    %v1031 = vunpack.c.h.b16 %v741
    %v1032 = vunpack.c.l.b16 %v742
    %v1033 = vunpack.c.h.b16 %v742
    %v1034 = vunpack.c.l.b16 %v743
    %v1035 = vunpack.c.h.b16 %v743
    %v1036 = vunpack.c.l.b16 %v744
    %v1037 = vunpack.c.h.b16 %v744
    %v1038 = vunpack.c.l.b16 %v745
    %v1039 = vunpack.c.h.b16 %v745
    %v1040 = vunpack.c.l.b16 %v746
    %v1041 = vunpack.c.h.b16 %v746
    %v1042 = vunpack.c.l.b16 %v747
    %v1043 = vunpack.c.h.b16 %v747
    %v1044 = vunpack.c.l.b16 %v748
    %v1045 = vunpack.c.h.b16 %v748
    %v1046 = vunpack.c.l.b16 %v749
    %v1047 = vunpack.c.h.b16 %v749
    %v1048 = vunpack.c.l.b16 %v750
    %v1049 = vunpack.c.h.b16 %v750
    %v1050 = vunpack.c.l.b16 %v751
    %v1051 = vunpack.c.h.b16 %v751
    %v1052 = vunpack.c.l.b16 %v752
    %v1053 = vunpack.c.h.b16 %v752
    %v1054 = vunpack.c.l.b16 %v753
    %v1055 = vunpack.c.h.b16 %v753
    %v1056 = vunpack.c.l.b16 %v754
    %v1057 = vunpack.c.h.b16 %v754
    %v1058 = vunpack.c.l.b16 %v755
    %v1059 = vunpack.c.h.b16 %v755
    %v1060 = vunpack.c.l.b16 %v756
    %v1061 = vunpack.c.h.b16 %v756
    %v1062 = vunpack.c.l.b16 %v757
    %v1063 = vunpack.c.h.b16 %v757
    %v1064 = vunpack.c.l.b16 %v758
    %v1065 = vunpack.c.h.b16 %v758
    %v1066 = vunpack.c.l.b16 %v759
    %v1067 = vunpack.c.h.b16 %v759
    %v1068 = vunpack.c.l.b16 %v760
    %v1069 = vunpack.c.h.b16 %v760
    %v1070 = vunpack.c.l.b16 %v761
    %v1071 = vunpack.c.h.b16 %v761
    %v1072 = vunpack.c.l.b16 %v762
    %v1073 = vunpack.c.h.b16 %v762
    %v1074 = vunpack.c.l.b16 %v763
    %v1075 = vunpack.c.h.b16 %v763
    %v1076 = vunpack.c.l.b16 %v764
    %v1077 = vunpack.c.h.b16 %v764
    %v1078 = vunpack.c.l.b16 %v765
    %v1079 = vunpack.c.h.b16 %v765
    %v1080 = vunpack.c.l.b16 %v766
    %v1081 = vunpack.c.h.b16 %v766
    %v1082 = vunpack.c.l.b16 %v767
    %v1083 = vunpack.c.h.b16 %v767
    %v1084 = vunpack.c.l.b16 %v768
    %v1085 = vunpack.c.h.b16 %v768
    %v1086 = vunpack.c.l.b16 %v769
    %v1087 = vunpack.c.h.b16 %v769
    %v1088 = vunpack.c.l.b16 %v770
    %v1089 = vunpack.c.h.b16 %v770
    %v1090 = vunpack.c.l.b16 %v771
    %v1091 = vunpack.c.h.b16 %v771
    %v1092 = vunpack.c.l.b16 %v772
    %v1093 = vunpack.c.h.b16 %v772
    %v1094 = vunpack.c.l.b16 %v773
    %v1095 = vunpack.c.h.b16 %v773
    %v1096 = vunpack.c.l.b16 %v774
    %v1097 = vunpack.c.h.b16 %v774
    %v1098 = vunpack.c.l.b16 %v775
    %v1099 = vunpack.c.h.b16 %v775
    %v1100 = vunpack.c.l.b16 %v776
    %v1101 = vunpack.c.h.b16 %v776
    %v1102 = vunpack.c.l.b16 %v777
    %v1103 = vunpack.c.h.b16 %v777
    %v1104 = vunpack.c.l.b16 %v778
    %v1105 = vunpack.c.h.b16 %v778
    %v1106 = vunpack.c.l.b16 %v779
    %v1107 = vunpack.c.h.b16 %v779
    %v1108 = vunpack.c.l.b16 %v780
    %v1109 = vunpack.c.h.b16 %v780
    %v1110 = vunpack.c.l.b16 %v781
    %v1111 = vunpack.c.h.b16 %v781
    %v1112 = vunpack.c.l.b16 %v782
    %v1113 = vunpack.c.h.b16 %v782
    %v1114 = vunpack.c.l.b16 %v783
    %v1115 = vunpack.c.h.b16 %v783
    %v1116 = vunpack.c.l.b16 %v784
    %v1117 = vunpack.c.h.b16 %v784
    %v1118 = vunpack.c.l.b16 %v785
    %v1119 = vunpack.c.h.b16 %v785
    %v1120 = vunpack.c.l.b16 %v786
    %v1121 = vunpack.c.h.b16 %v786
    %v1122 = vunpack.c.l.b16 %v787
    %v1123 = vunpack.c.h.b16 %v787
    %v1124 = vunpack.c.l.b16 %v788
    %v1125 = vunpack.c.h.b16 %v788
    %v1126 = vunpack.c.l.b16 %v789
    %v1127 = vunpack.c.h.b16 %v789
    %v1128 = vunpack.c.l.b16 %v790
    %v1129 = vunpack.c.h.b16 %v790
    %v1130 = vunpack.c.l.b16 %v791
    %v1131 = vunpack.c.h.b16 %v791
    %v1132 = vunpack.c.l.b16 %v792
    %v1133 = vunpack.c.h.b16 %v792
    %v1134 = vunpack.c.l.b16 %v793
    %v1135 = vunpack.c.h.b16 %v793
    %v1136 = vunpack.c.l.b16 %v794
    %v1137 = vunpack.c.h.b16 %v794
    %v1138 = vunpack.c.l.b16 %v795
    %v1139 = vunpack.c.h.b16 %v795
    %v1140 = vunpack.c.l.b16 %v796
    %v1141 = vunpack.c.h.b16 %v796
    %v1142 = vunpack.c.l.b16 %v797
    %v1143 = vunpack.c.h.b16 %v797
    %v1144 = vunpack.c.l.b16 %v798
    %v1145 = vunpack.c.h.b16 %v798
    %v1146 = vunpack.c.l.b16 %v799
    %v1147 = vunpack.c.h.b16 %v799
    %v1148 = vunpack.c.l.b16 %v800
    %v1149 = vunpack.c.h.b16 %v800
    %v1150 = vunpack.c.l.b16 %v801
    %v1151 = vunpack.c.h.b16 %v801
    %v1152 = vunpack.c.l.b16 %v802
    %v1153 = vunpack.c.h.b16 %v802
    %v1154 = vunpack.c.l.b16 %v803
    %v1155 = vunpack.c.h.b16 %v803
    %v1156 = vunpack.c.l.b16 %v804
    %v1157 = vunpack.c.h.b16 %v804
    %v1158 = vunpack.c.l.b16 %v805
    %v1159 = vunpack.c.h.b16 %v805
    %v1160 = vunpack.c.l.b16 %v806
    %v1161 = vunpack.c.h.b16 %v806
    %v1162 = vunpack.c.l.b16 %v807
    %v1163 = vunpack.c.h.b16 %v807
    %v1164 = vunpack.c.l.b16 %v808
    %v1165 = vunpack.c.h.b16 %v808
    %v1166 = vunpack.c.l.b16 %v809
    %v1167 = vunpack.c.h.b16 %v809
    %v1168 = vunpack.c.l.b16 %v810
    %v1169 = vunpack.c.h.b16 %v810
    %v1170 = vunpack.c.l.b16 %v811
    %v1171 = vunpack.c.h.b16 %v811
    %v1172 = vunpack.c.l.b16 %v812
    %v1173 = vunpack.c.h.b16 %v812
    %v1174 = vunpack.c.l.b16 %v813
    %v1175 = vunpack.c.h.b16 %v813
    %v1176 = vunpack.c.l.b16 %v814
    %v1177 = vunpack.c.h.b16 %v814
    %v1178 = vunpack.c.l.b16 %v815
    %v1179 = vunpack.c.h.b16 %v815
    %v1180 = vunpack.c.l.b16 %v816
    %v1181 = vunpack.c.h.b16 %v816
    %v1182 = vunpack.c.l.b16 %v817
    %v1183 = vunpack.c.h.b16 %v817
    %v1184 = vunpack.c.l.b16 %v818
    %v1185 = vunpack.c.h.b16 %v818
    %v1186 = vunpack.c.l.b16 %v819
    %v1187 = vunpack.c.h.b16 %v819
    %v1188 = vunpack.c.l.b16 %v820
    %v1189 = vunpack.c.h.b16 %v820
    %v1190 = vunpack.c.l.b16 %v821
    %v1191 = vunpack.c.h.b16 %v821
    %v1192 = vunpack.c.l.b16 %v822
    %v1193 = vunpack.c.h.b16 %v822
    %v1194 = vunpack.c.l.b16 %v823
    %v1195 = vunpack.c.h.b16 %v823
    %v1196 = vunpack.c.l.b16 %v824
    %v1197 = vunpack.c.h.b16 %v824
    %v1198 = vunpack.c.l.b16 %v825
    %v1199 = vunpack.c.h.b16 %v825
    %v1200 = vunpack.c.l.b16 %v826
    %v1201 = vunpack.c.h.b16 %v826
    %v1202 = vunpack.c.l.b16 %v827
    %v1203 = vunpack.c.h.b16 %v827
    %v1204 = vunpack.c.l.b16 %v828
    %v1205 = vunpack.c.h.b16 %v828
    %v1206 = vunpack.c.l.b16 %v829
    %v1207 = vunpack.c.h.b16 %v829
    %v1208 = vunpack.c.l.b16 %v830
    %v1209 = vunpack.c.h.b16 %v830
    %v1210 = vunpack.c.l.b16 %v831
    %v1211 = vunpack.c.h.b16 %v831
    %v1212 = vunpack.c.l.b16 %v832
    %v1213 = vunpack.c.h.b16 %v832
    %v1214 = vunpack.c.l.b16 %v833
    %v1215 = vunpack.c.h.b16 %v833
    %v1216 = vunpack.c.l.b16 %v834
    %v1217 = vunpack.c.h.b16 %v834
    %v1218 = vunpack.c.l.b16 %v835
    %v1219 = vunpack.c.h.b16 %v835
    %v1220 = vunpack.c.l.b16 %v836
    %v1221 = vunpack.c.h.b16 %v836
    %v1222 = vunpack.c.l.b16 %v837
    %v1223 = vunpack.c.h.b16 %v837
    %v1224 = vunpack.c.l.b16 %v838
    %v1225 = vunpack.c.h.b16 %v838
    %v1226 = vunpack.c.l.b16 %v839
    %v1227 = vunpack.c.h.b16 %v839
    %v1228 = vunpack.c.l.b16 %v840
    %v1229 = vunpack.c.h.b16 %v840
    %v1230 = vunpack.c.l.b16 %v841
    %v1231 = vunpack.c.h.b16 %v841
    %v1232 = vunpack.c.l.b16 %v842
    %v1233 = vunpack.c.h.b16 %v842
    %v1234 = vunpack.c.l.b16 %v843
    %v1235 = vunpack.c.h.b16 %v843
    %v1236 = vunpack.c.l.b16 %v844
    %v1237 = vunpack.c.h.b16 %v844
    %v1238 = vunpack.c.l.b16 %v845
    %v1239 = vunpack.c.h.b16 %v845
    %v1240 = vunpack.c.l.b16 %v846
    %v1241 = vunpack.c.h.b16 %v846
    %v1242 = vunpack.c.l.b16 %v847
    %v1243 = vunpack.c.h.b16 %v847
    %v1244 = vunpack.c.l.b16 %v848
    %v1245 = vunpack.c.h.b16 %v848
    %v1246 = vunpack.c.l.b16 %v849
    %v1247 = vunpack.c.h.b16 %v849
    %v1248 = vunpack.c.l.b16 %v850
    %v1249 = vunpack.c.h.b16 %v850
    %v1250 = vunpack.c.l.b16 %v851
    %v1251 = vunpack.c.h.b16 %v851
    %v1252 = vunpack.c.l.b16 %v852
    %v1253 = vunpack.c.h.b16 %v852
    %v1254 = vunpack.c.l.b16 %v853
    %v1255 = vunpack.c.h.b16 %v853
    %v1256 = vunpack.c.l.b16 %v854
    %v1257 = vunpack.c.h.b16 %v854
    %v1258 = vunpack.c.l.b16 %v855
    %v1259 = vunpack.c.h.b16 %v855
    %v1260 = vunpack.c.l.b16 %v856
    %v1261 = vunpack.c.h.b16 %v856
    %v1262 = vunpack.c.l.b16 %v857
    %v1263 = vunpack.c.h.b16 %v857
    %v1264 = vunpack.c.l.b16 %v858
    %v1265 = vunpack.c.h.b16 %v858
    %v1266 = vunpack.c.l.b16 %v859
    %v1267 = vunpack.c.h.b16 %v859
    %v1268 = vunpack.c.l.b16 %v860
    %v1269 = vunpack.c.h.b16 %v860
    %v1270 = vunpack.c.l.b16 %v861
    %v1271 = vunpack.c.h.b16 %v861
    %v1272 = vunpack.c.l.b16 %v862
    %v1273 = vunpack.c.h.b16 %v862
    %v1274 = vunpack.c.l.b16 %v863
    %v1275 = vunpack.c.h.b16 %v863
    %v1276 = vunpack.c.l.b16 %v864
    %v1277 = vunpack.c.h.b16 %v864
    %v1278 = vunpack.c.l.b16 %v865
    %v1279 = vunpack.c.h.b16 %v865
    %v1280 = vunpack.c.l.b16 %v866
    %v1281 = vunpack.c.h.b16 %v866
    %v1282 = vunpack.c.l.b16 %v867
    %v1283 = vunpack.c.h.b16 %v867
    %v1284 = vpack.c.b16 %v1032, %v1028
    %v1285 = vpack.c.b16 %v1033, %v1029
    %v1286 = vpack.c.b16 %v1034, %v1030
    %v1287 = vpack.c.b16 %v1035, %v1031
    %v1288 = vpack.c.b16 %v1040, %v1036
    %v1289 = vpack.c.b16 %v1041, %v1037
    %v1290 = vpack.c.b16 %v1042, %v1038
    %v1291 = vpack.c.b16 %v1043, %v1039
    %v1292 = vpack.c.b16 %v1048, %v1044
    %v1293 = vpack.c.b16 %v1049, %v1045
    %v1294 = vpack.c.b16 %v1050, %v1046
    %v1295 = vpack.c.b16 %v1051, %v1047
    %v1296 = vpack.c.b16 %v1056, %v1052
    %v1297 = vpack.c.b16 %v1057, %v1053
    %v1298 = vpack.c.b16 %v1058, %v1054
    %v1299 = vpack.c.b16 %v1059, %v1055
    %v1300 = vpack.c.b16 %v1064, %v1060
    %v1301 = vpack.c.b16 %v1065, %v1061
    %v1302 = vpack.c.b16 %v1066, %v1062
    %v1303 = vpack.c.b16 %v1067, %v1063
    %v1304 = vpack.c.b16 %v1072, %v1068
    %v1305 = vpack.c.b16 %v1073, %v1069
    %v1306 = vpack.c.b16 %v1074, %v1070
    %v1307 = vpack.c.b16 %v1075, %v1071
    %v1308 = vpack.c.b16 %v1080, %v1076
    %v1309 = vpack.c.b16 %v1081, %v1077
    %v1310 = vpack.c.b16 %v1082, %v1078
    %v1311 = vpack.c.b16 %v1083, %v1079
    %v1312 = vpack.c.b16 %v1088, %v1084
    %v1313 = vpack.c.b16 %v1089, %v1085
    %v1314 = vpack.c.b16 %v1090, %v1086
    %v1315 = vpack.c.b16 %v1091, %v1087
    %v1316 = vpack.c.b16 %v1096, %v1092
    %v1317 = vpack.c.b16 %v1097, %v1093
    %v1318 = vpack.c.b16 %v1098, %v1094
    %v1319 = vpack.c.b16 %v1099, %v1095
    %v1320 = vpack.c.b16 %v1104, %v1100
    %v1321 = vpack.c.b16 %v1105, %v1101
    %v1322 = vpack.c.b16 %v1106, %v1102
    %v1323 = vpack.c.b16 %v1107, %v1103
    %v1324 = vpack.c.b16 %v1112, %v1108
    %v1325 = vpack.c.b16 %v1113, %v1109
    %v1326 = vpack.c.b16 %v1114, %v1110
    %v1327 = vpack.c.b16 %v1115, %v1111
    %v1328 = vpack.c.b16 %v1120, %v1116
    %v1329 = vpack.c.b16 %v1121, %v1117
    %v1330 = vpack.c.b16 %v1122, %v1118
    %v1331 = vpack.c.b16 %v1123, %v1119
    %v1332 = vpack.c.b16 %v1128, %v1124
    %v1333 = vpack.c.b16 %v1129, %v1125
    %v1334 = vpack.c.b16 %v1130, %v1126
    %v1335 = vpack.c.b16 %v1131, %v1127
    %v1336 = vpack.c.b16 %v1136, %v1132
    %v1337 = vpack.c.b16 %v1137, %v1133
    %v1338 = vpack.c.b16 %v1138, %v1134
    %v1339 = vpack.c.b16 %v1139, %v1135
    %v1340 = vpack.c.b16 %v1144, %v1140
    %v1341 = vpack.c.b16 %v1145, %v1141
    %v1342 = vpack.c.b16 %v1146, %v1142
    %v1343 = vpack.c.b16 %v1147, %v1143
    %v1344 = vpack.c.b16 %v1152, %v1148
    %v1345 = vpack.c.b16 %v1153, %v1149
    %v1346 = vpack.c.b16 %v1154, %v1150
    %v1347 = vpack.c.b16 %v1155, %v1151
    %v1348 = vpack.c.b16 %v1160, %v1156
    %v1349 = vpack.c.b16 %v1161, %v1157
    %v1350 = vpack.c.b16 %v1162, %v1158
    %v1351 = vpack.c.b16 %v1163, %v1159
    %v1352 = vpack.c.b16 %v1168, %v1164
    %v1353 = vpack.c.b16 %v1169, %v1165
    %v1354 = vpack.c.b16 %v1170, %v1166
    %v1355 = vpack.c.b16 %v1171, %v1167
    %v1356 = vpack.c.b16 %v1176, %v1172
    %v1357 = vpack.c.b16 %v1177, %v1173
    %v1358 = vpack.c.b16 %v1178, %v1174
    %v1359 = vpack.c.b16 %v1179, %v1175
    %v1360 = vpack.c.b16 %v1184, %v1180
    %v1361 = vpack.c.b16 %v1185, %v1181
    %v1362 = vpack.c.b16 %v1186, %v1182
    %v1363 = vpack.c.b16 %v1187, %v1183
    %v1364 = vpack.c.b16 %v1192, %v1188
    %v1365 = vpack.c.b16 %v1193, %v1189
    %v1366 = vpack.c.b16 %v1194, %v1190
    %v1367 = vpack.c.b16 %v1195, %v1191
    %v1368 = vpack.c.b16 %v1200, %v1196
    %v1369 = vpack.c.b16 %v1201, %v1197
    %v1370 = vpack.c.b16 %v1202, %v1198
    %v1371 = vpack.c.b16 %v1203, %v1199
    %v1372 = vpack.c.b16 %v1208, %v1204
    %v1373 = vpack.c.b16 %v1209, %v1205
    %v1374 = vpack.c.b16 %v1210, %v1206
    %v1375 = vpack.c.b16 %v1211, %v1207
    %v1376 = vpack.c.b16 %v1216, %v1212
    %v1377 = vpack.c.b16 %v1217, %v1213
    %v1378 = vpack.c.b16 %v1218, %v1214
    %v1379 = vpack.c.b16 %v1219, %v1215
    %v1380 = vpack.c.b16 %v1224, %v1220
    %v1381 = vpack.c.b16 %v1225, %v1221
    %v1382 = vpack.c.b16 %v1226, %v1222
    %v1383 = vpack.c.b16 %v1227, %v1223
    %v1384 = vpack.c.b16 %v1232, %v1228
    %v1385 = vpack.c.b16 %v1233, %v1229
    %v1386 = vpack.c.b16 %v1234, %v1230
    %v1387 = vpack.c.b16 %v1235, %v1231
    %v1388 = vpack.c.b16 %v1240, %v1236
    %v1389 = vpack.c.b16 %v1241, %v1237
    %v1390 = vpack.c.b16 %v1242, %v1238
    %v1391 = vpack.c.b16 %v1243, %v1239
    %v1392 = vpack.c.b16 %v1248, %v1244
    %v1393 = vpack.c.b16 %v1249, %v1245
    %v1394 = vpack.c.b16 %v1250, %v1246
    %v1395 = vpack.c.b16 %v1251, %v1247
    %v1396 = vpack.c.b16 %v1256, %v1252
    %v1397 = vpack.c.b16 %v1257, %v1253
    %v1398 = vpack.c.b16 %v1258, %v1254
    %v1399 = vpack.c.b16 %v1259, %v1255
    %v1400 = vpack.c.b16 %v1264, %v1260
    %v1401 = vpack.c.b16 %v1265, %v1261
    %v1402 = vpack.c.b16 %v1266, %v1262
    %v1403 = vpack.c.b16 %v1267, %v1263
    %v1404 = vpack.c.b16 %v1272, %v1268
    %v1405 = vpack.c.b16 %v1273, %v1269
    %v1406 = vpack.c.b16 %v1274, %v1270
    %v1407 = vpack.c.b16 %v1275, %v1271
    %v1408 = vpack.c.b16 %v1280, %v1276
    %v1409 = vpack.c.b16 %v1281, %v1277
    %v1410 = vpack.c.b16 %v1282, %v1278
    %v1411 = vpack.c.b16 %v1283, %v1279
    %1540 = vmatprep.subr.bf16.mxu0 0
    %1541 = vmatpush1.bf16.msra.mxu0 %v868
    %1542 = vmatprep.subr.bf16.mxu0 0
    %1543 = vmatpush1.bf16.msra.mxu0 %v869
    %1544 = vmatprep.subr.bf16.mxu0 0
    %1545 = vmatpush1.bf16.msra.mxu0 %v870
    %1546 = vmatprep.subr.bf16.mxu0 0
    %1547 = vmatpush1.bf16.msra.mxu0 %v871
    %1548 = vmatprep.subr.bf16.mxu0 0
    %1549 = vmatpush1.bf16.msra.mxu0 %v872
    %1550 = vmatprep.subr.bf16.mxu0 0
    %1551 = vmatpush1.bf16.msra.mxu0 %v873
    %1552 = vmatprep.subr.bf16.mxu0 0
    %1553 = vmatpush1.bf16.msra.mxu0 %v874
    %1554 = vmatprep.subr.bf16.mxu0 0
    %1555 = vmatpush1.bf16.msra.mxu0 %v875
    %1556 = vmatprep.subr.bf16.mxu0 0
    %1557 = vmatpush1.bf16.msra.mxu0 %v876
    %1558 = vmatprep.subr.bf16.mxu0 0
    %1559 = vmatpush1.bf16.msra.mxu0 %v877
    %1560 = vmatprep.subr.bf16.mxu0 0
    %1561 = vmatpush1.bf16.msra.mxu0 %v878
    %1562 = vmatprep.subr.bf16.mxu0 0
    %1563 = vmatpush1.bf16.msra.mxu0 %v879
    %1564 = vmatprep.subr.bf16.mxu0 0
    %1565 = vmatpush1.bf16.msra.mxu0 %v880
    %1566 = vmatprep.subr.bf16.mxu0 0
    %1567 = vmatpush1.bf16.msra.mxu0 %v881
    %1568 = vmatprep.subr.bf16.mxu0 0
    %1569 = vmatpush1.bf16.msra.mxu0 %v882
    %1570 = vmatprep.subr.bf16.mxu0 0
    %1571 = vmatpush1.bf16.msra.mxu0 %v883
    %1572 = vmatprep.mubr.bf16.mxu0 %v1285
    %1573 = vmatmul.mubr.bf16.gmra.mrb[0].mxu0 %v1284
    %v1574 = vpop.f32.mrb[0].mxu0
    %v1575 = vadd.f32 0.0, %v1574
    %v1576 = vpop.f32.mrb[0].mxu0
    %v1577 = vpop.f32.mrb[0].mxu0
    %v1578 = vadd.f32 0.0, %v1577
    %v1579 = vpop.f32.mrb[0].mxu0
    %1580 = vmatprep.mubr.bf16.mxu0 %v1289
    %1581 = vmatmul.mubr.bf16.gmra.mrb[0].mxu0 %v1288
    %v1582 = vpop.f32.mrb[0].mxu0
    %v1583 = vadd.f32 0.0, %v1582
    %v1584 = vpop.f32.mrb[0].mxu0
    %v1585 = vpop.f32.mrb[0].mxu0
    %v1586 = vadd.f32 0.0, %v1585
    %v1587 = vpop.f32.mrb[0].mxu0
    %1588 = vmatprep.mubr.bf16.mxu0 %v1293
    %1589 = vmatmul.mubr.bf16.gmra.mrb[0].mxu0 %v1292
    %v1590 = vpop.f32.mrb[0].mxu0
    %v1591 = vadd.f32 0.0, %v1590
    %v1592 = vpop.f32.mrb[0].mxu0
    %v1593 = vpop.f32.mrb[0].mxu0
    %v1594 = vadd.f32 0.0, %v1593
    %v1595 = vpop.f32.mrb[0].mxu0
    %1596 = vmatprep.mubr.bf16.mxu0 %v1297
    %1597 = vmatmul.mubr.bf16.gmra.mrb[0].mxu0 %v1296
    %v1598 = vpop.f32.mrb[0].mxu0
    %v1599 = vadd.f32 0.0, %v1598
    %v1600 = vpop.f32.mrb[0].mxu0
    %v1601 = vpop.f32.mrb[0].mxu0
    %v1602 = vadd.f32 0.0, %v1601
    %v1603 = vpop.f32.mrb[0].mxu0
    %1604 = vmatprep.mubr.bf16.mxu0 %v1301
    %1605 = vmatmul.mubr.bf16.gmra.mrb[0].mxu0 %v1300
    %v1606 = vpop.f32.mrb[0].mxu0
    %v1607 = vadd.f32 0.0, %v1606
    %v1608 = vpop.f32.mrb[0].mxu0
    %v1609 = vpop.f32.mrb[0].mxu0
    %v1610 = vadd.f32 0.0, %v1609
    %v1611 = vpop.f32.mrb[0].mxu0
    %1612 = vmatprep.mubr.bf16.mxu0 %v1305
    %1613 = vmatmul.mubr.bf16.gmra.mrb[0].mxu0 %v1304
    %v1614 = vpop.f32.mrb[0].mxu0
    %v1615 = vadd.f32 0.0, %v1614
    %v1616 = vpop.f32.mrb[0].mxu0
    %v1617 = vpop.f32.mrb[0].mxu0
    %v1618 = vadd.f32 0.0, %v1617
    %v1619 = vpop.f32.mrb[0].mxu0
    %1620 = vmatprep.mubr.bf16.mxu0 %v1309
    %1621 = vmatmul.mubr.bf16.gmra.mrb[0].mxu0 %v1308
    %v1622 = vpop.f32.mrb[0].mxu0
    %v1623 = vadd.f32 0.0, %v1622
    %v1624 = vpop.f32.mrb[0].mxu0
    %v1625 = vpop.f32.mrb[0].mxu0
    %v1626 = vadd.f32 0.0, %v1625
    %v1627 = vpop.f32.mrb[0].mxu0
    %1628 = vmatprep.mubr.bf16.mxu0 %v1313
    %1629 = vmatmul.mubr.bf16.gmra.mrb[0].mxu0 %v1312
    %v1630 = vpop.f32.mrb[0].mxu0
    %v1631 = vadd.f32 0.0, %v1630
    %v1632 = vpop.f32.mrb[0].mxu0
    %v1633 = vpop.f32.mrb[0].mxu0
    %v1634 = vadd.f32 0.0, %v1633
    %v1635 = vpop.f32.mrb[0].mxu0
    %1636 = vmatprep.mubr.bf16.mxu0 %v1317
    %1637 = vmatmul.mubr.bf16.gmra.mrb[0].mxu0 %v1316
    %v1638 = vpop.f32.mrb[0].mxu0
    %v1639 = vadd.f32 0.0, %v1638
    %v1640 = vpop.f32.mrb[0].mxu0
    %v1641 = vpop.f32.mrb[0].mxu0
    %v1642 = vadd.f32 0.0, %v1641
    %v1643 = vpop.f32.mrb[0].mxu0
    %1644 = vmatprep.mubr.bf16.mxu0 %v1321
    %1645 = vmatmul.mubr.bf16.gmra.mrb[0].mxu0 %v1320
    %v1646 = vpop.f32.mrb[0].mxu0
    %v1647 = vadd.f32 0.0, %v1646
    %v1648 = vpop.f32.mrb[0].mxu0
    %v1649 = vpop.f32.mrb[0].mxu0
    %v1650 = vadd.f32 0.0, %v1649
    %v1651 = vpop.f32.mrb[0].mxu0
    %1652 = vmatprep.mubr.bf16.mxu0 %v1325
    %1653 = vmatmul.mubr.bf16.gmra.mrb[0].mxu0 %v1324
    %v1654 = vpop.f32.mrb[0].mxu0
    %v1655 = vadd.f32 0.0, %v1654
    %v1656 = vpop.f32.mrb[0].mxu0
    %v1657 = vpop.f32.mrb[0].mxu0
    %v1658 = vadd.f32 0.0, %v1657
    %v1659 = vpop.f32.mrb[0].mxu0
    %1660 = vmatprep.mubr.bf16.mxu0 %v1329
    %1661 = vmatmul.mubr.bf16.gmra.mrb[0].mxu0 %v1328
    %v1662 = vpop.f32.mrb[0].mxu0
    %v1663 = vadd.f32 0.0, %v1662
    %v1664 = vpop.f32.mrb[0].mxu0
    %v1665 = vpop.f32.mrb[0].mxu0
    %v1666 = vadd.f32 0.0, %v1665
    %v1667 = vpop.f32.mrb[0].mxu0
    %1668 = vmatprep.mubr.bf16.mxu0 %v1333
    %1669 = vmatmul.mubr.bf16.gmra.mrb[0].mxu0 %v1332
    %v1670 = vpop.f32.mrb[0].mxu0
    %v1671 = vadd.f32 0.0, %v1670
    %v1672 = vpop.f32.mrb[0].mxu0
    %v1673 = vpop.f32.mrb[0].mxu0
    %v1674 = vadd.f32 0.0, %v1673
    %v1675 = vpop.f32.mrb[0].mxu0
    %1676 = vmatprep.mubr.bf16.mxu0 %v1337
    %1677 = vmatmul.mubr.bf16.gmra.mrb[0].mxu0 %v1336
    %v1678 = vpop.f32.mrb[0].mxu0
    %v1679 = vadd.f32 0.0, %v1678
    %v1680 = vpop.f32.mrb[0].mxu0
    %v1681 = vpop.f32.mrb[0].mxu0
    %v1682 = vadd.f32 0.0, %v1681
    %v1683 = vpop.f32.mrb[0].mxu0
    %1684 = vmatprep.mubr.bf16.mxu0 %v1341
    %1685 = vmatmul.mubr.bf16.gmra.mrb[0].mxu0 %v1340
    %v1686 = vpop.f32.mrb[0].mxu0
    %v1687 = vadd.f32 0.0, %v1686
    %v1688 = vpop.f32.mrb[0].mxu0
    %v1689 = vpop.f32.mrb[0].mxu0
    %v1690 = vadd.f32 0.0, %v1689
    %v1691 = vpop.f32.mrb[0].mxu0
    %1692 = vmatprep.mubr.bf16.mxu0 %v1345
    %1693 = vmatmul.mubr.bf16.gmra.mrb[0].mxu0 %v1344
    %v1694 = vpop.f32.mrb[0].mxu0
    %v1695 = vadd.f32 0.0, %v1694
    %v1696 = vpop.f32.mrb[0].mxu0
    %v1697 = vpop.f32.mrb[0].mxu0
    %v1698 = vadd.f32 0.0, %v1697
    %v1699 = vpop.f32.mrb[0].mxu0
    %1700 = vmatprep.mubr.bf16.mxu0 %v1349
    %1701 = vmatmul.mubr.bf16.gmra.mrb[0].mxu0 %v1348
    %v1702 = vpop.f32.mrb[0].mxu0
    %v1703 = vadd.f32 0.0, %v1702
    %v1704 = vpop.f32.mrb[0].mxu0
    %v1705 = vpop.f32.mrb[0].mxu0
    %v1706 = vadd.f32 0.0, %v1705
    %v1707 = vpop.f32.mrb[0].mxu0
    %1708 = vmatprep.mubr.bf16.mxu0 %v1353
    %1709 = vmatmul.mubr.bf16.gmra.mrb[0].mxu0 %v1352
    %v1710 = vpop.f32.mrb[0].mxu0
    %v1711 = vadd.f32 0.0, %v1710
    %v1712 = vpop.f32.mrb[0].mxu0
    %v1713 = vpop.f32.mrb[0].mxu0
    %v1714 = vadd.f32 0.0, %v1713
    %v1715 = vpop.f32.mrb[0].mxu0
    %1716 = vmatprep.mubr.bf16.mxu0 %v1357
    %1717 = vmatmul.mubr.bf16.gmra.mrb[0].mxu0 %v1356
    %v1718 = vpop.f32.mrb[0].mxu0
    %v1719 = vadd.f32 0.0, %v1718
    %v1720 = vpop.f32.mrb[0].mxu0
    %v1721 = vpop.f32.mrb[0].mxu0
    %v1722 = vadd.f32 0.0, %v1721
    %v1723 = vpop.f32.mrb[0].mxu0
    %1724 = vmatprep.mubr.bf16.mxu0 %v1361
    %1725 = vmatmul.mubr.bf16.gmra.mrb[0].mxu0 %v1360
    %v1726 = vpop.f32.mrb[0].mxu0
    %v1727 = vadd.f32 0.0, %v1726
    %v1728 = vpop.f32.mrb[0].mxu0
    %v1729 = vpop.f32.mrb[0].mxu0
    %v1730 = vadd.f32 0.0, %v1729
    %v1731 = vpop.f32.mrb[0].mxu0
    %1732 = vmatprep.mubr.bf16.mxu0 %v1365
    %1733 = vmatmul.mubr.bf16.gmra.mrb[0].mxu0 %v1364
    %v1734 = vpop.f32.mrb[0].mxu0
    %v1735 = vadd.f32 0.0, %v1734
    %v1736 = vpop.f32.mrb[0].mxu0
    %v1737 = vpop.f32.mrb[0].mxu0
    %v1738 = vadd.f32 0.0, %v1737
    %v1739 = vpop.f32.mrb[0].mxu0
    %1740 = vmatprep.mubr.bf16.mxu0 %v1369
    %1741 = vmatmul.mubr.bf16.gmra.mrb[0].mxu0 %v1368
    %v1742 = vpop.f32.mrb[0].mxu0
    %v1743 = vadd.f32 0.0, %v1742
    %v1744 = vpop.f32.mrb[0].mxu0
    %v1745 = vpop.f32.mrb[0].mxu0
    %v1746 = vadd.f32 0.0, %v1745
    %v1747 = vpop.f32.mrb[0].mxu0
    %1748 = vmatprep.mubr.bf16.mxu0 %v1373
    %1749 = vmatmul.mubr.bf16.gmra.mrb[0].mxu0 %v1372
    %v1750 = vpop.f32.mrb[0].mxu0
    %v1751 = vadd.f32 0.0, %v1750
    %v1752 = vpop.f32.mrb[0].mxu0
    %v1753 = vpop.f32.mrb[0].mxu0
    %v1754 = vadd.f32 0.0, %v1753
    %v1755 = vpop.f32.mrb[0].mxu0
    %1756 = vmatprep.mubr.bf16.mxu0 %v1377
    %1757 = vmatmul.mubr.bf16.gmra.mrb[0].mxu0 %v1376
    %v1758 = vpop.f32.mrb[0].mxu0
    %v1759 = vadd.f32 0.0, %v1758
    %v1760 = vpop.f32.mrb[0].mxu0
    %v1761 = vpop.f32.mrb[0].mxu0
    %v1762 = vadd.f32 0.0, %v1761
    %v1763 = vpop.f32.mrb[0].mxu0
    %1764 = vmatprep.mubr.bf16.mxu0 %v1381
    %1765 = vmatmul.mubr.bf16.gmra.mrb[0].mxu0 %v1380
    %v1766 = vpop.f32.mrb[0].mxu0
    %v1767 = vadd.f32 0.0, %v1766
    %v1768 = vpop.f32.mrb[0].mxu0
    %v1769 = vpop.f32.mrb[0].mxu0
    %v1770 = vadd.f32 0.0, %v1769
    %v1771 = vpop.f32.mrb[0].mxu0
    %1772 = vmatprep.mubr.bf16.mxu0 %v1385
    %1773 = vmatmul.mubr.bf16.gmra.mrb[0].mxu0 %v1384
    %v1774 = vpop.f32.mrb[0].mxu0
    %v1775 = vadd.f32 0.0, %v1774
    %v1776 = vpop.f32.mrb[0].mxu0
    %v1777 = vpop.f32.mrb[0].mxu0
    %v1778 = vadd.f32 0.0, %v1777
    %v1779 = vpop.f32.mrb[0].mxu0
    %1780 = vmatprep.mubr.bf16.mxu0 %v1389
    %1781 = vmatmul.mubr.bf16.gmra.mrb[0].mxu0 %v1388
    %v1782 = vpop.f32.mrb[0].mxu0
    %v1783 = vadd.f32 0.0, %v1782
    %v1784 = vpop.f32.mrb[0].mxu0
    %v1785 = vpop.f32.mrb[0].mxu0
    %v1786 = vadd.f32 0.0, %v1785
    %v1787 = vpop.f32.mrb[0].mxu0
    %1788 = vmatprep.mubr.bf16.mxu0 %v1393
    %1789 = vmatmul.mubr.bf16.gmra.mrb[0].mxu0 %v1392
    %v1790 = vpop.f32.mrb[0].mxu0
    %v1791 = vadd.f32 0.0, %v1790
    %v1792 = vpop.f32.mrb[0].mxu0
    %v1793 = vpop.f32.mrb[0].mxu0
    %v1794 = vadd.f32 0.0, %v1793
    %v1795 = vpop.f32.mrb[0].mxu0
    %1796 = vmatprep.mubr.bf16.mxu0 %v1397
    %1797 = vmatmul.mubr.bf16.gmra.mrb[0].mxu0 %v1396
    %v1798 = vpop.f32.mrb[0].mxu0
    %v1799 = vadd.f32 0.0, %v1798
    %v1800 = vpop.f32.mrb[0].mxu0
    %v1801 = vpop.f32.mrb[0].mxu0
    %v1802 = vadd.f32 0.0, %v1801
    %v1803 = vpop.f32.mrb[0].mxu0
    %1804 = vmatprep.mubr.bf16.mxu0 %v1401
    %1805 = vmatmul.mubr.bf16.gmra.mrb[0].mxu0 %v1400
    %v1806 = vpop.f32.mrb[0].mxu0
    %v1807 = vadd.f32 0.0, %v1806
    %v1808 = vpop.f32.mrb[0].mxu0
    %v1809 = vpop.f32.mrb[0].mxu0
    %v1810 = vadd.f32 0.0, %v1809
    %v1811 = vpop.f32.mrb[0].mxu0
    %1812 = vmatprep.mubr.bf16.mxu0 %v1405
    %1813 = vmatmul.mubr.bf16.gmra.mrb[0].mxu0 %v1404
    %v1814 = vpop.f32.mrb[0].mxu0
    %v1815 = vadd.f32 0.0, %v1814
    %v1816 = vpop.f32.mrb[0].mxu0
    %v1817 = vpop.f32.mrb[0].mxu0
    %v1818 = vadd.f32 0.0, %v1817
    %v1819 = vpop.f32.mrb[0].mxu0
    %1820 = vmatprep.mubr.bf16.mxu0 %v1409
    %1821 = vmatmul.mubr.bf16.gmra.mrb[0].mxu0 %v1408
    %v1822 = vpop.f32.mrb[0].mxu0
    %v1823 = vadd.f32 0.0, %v1822
    %v1824 = vpop.f32.mrb[0].mxu0
    %v1825 = vpop.f32.mrb[0].mxu0
    %v1826 = vadd.f32 0.0, %v1825
    %v1827 = vpop.f32.mrb[0].mxu0
    %1828 = vdwg.mxu0
    %1829 = vmatprep.subr.bf16.mxu0 0
    %1830 = vmatpush1.bf16.msra.mxu0 %v884
    %1831 = vmatprep.subr.bf16.mxu0 0
    %1832 = vmatpush1.bf16.msra.mxu0 %v885
    %1833 = vmatprep.subr.bf16.mxu0 0
    %1834 = vmatpush1.bf16.msra.mxu0 %v886
    %1835 = vmatprep.subr.bf16.mxu0 0
    %1836 = vmatpush1.bf16.msra.mxu0 %v887
    %1837 = vmatprep.subr.bf16.mxu0 0
    %1838 = vmatpush1.bf16.msra.mxu0 %v888
    %1839 = vmatprep.subr.bf16.mxu0 0
    %1840 = vmatpush1.bf16.msra.mxu0 %v889
    %1841 = vmatprep.subr.bf16.mxu0 0
    %1842 = vmatpush1.bf16.msra.mxu0 %v890
    %1843 = vmatprep.subr.bf16.mxu0 0
    %1844 = vmatpush1.bf16.msra.mxu0 %v891
    %1845 = vmatprep.subr.bf16.mxu0 0
    %1846 = vmatpush1.bf16.msra.mxu0 %v892
    %1847 = vmatprep.subr.bf16.mxu0 0
    %1848 = vmatpush1.bf16.msra.mxu0 %v893
    %1849 = vmatprep.subr.bf16.mxu0 0
    %1850 = vmatpush1.bf16.msra.mxu0 %v894
    %1851 = vmatprep.subr.bf16.mxu0 0
    %1852 = vmatpush1.bf16.msra.mxu0 %v895
    %1853 = vmatprep.subr.bf16.mxu0 0
    %1854 = vmatpush1.bf16.msra.mxu0 %v896
    %1855 = vmatprep.subr.bf16.mxu0 0
    %1856 = vmatpush1.bf16.msra.mxu0 %v897
    %1857 = vmatprep.subr.bf16.mxu0 0
    %1858 = vmatpush1.bf16.msra.mxu0 %v898
    %1859 = vmatprep.subr.bf16.mxu0 0
    %1860 = vmatpush1.bf16.msra.mxu0 %v899
    %1861 = vmatprep.mubr.bf16.mxu0 %v1287
    %1862 = vmatmul.mubr.bf16.gmra.mrb[0].mxu0 %v1286
    %v1863 = vpop.f32.mrb[0].mxu0
    %v1864 = vadd.f32 %v1575, %v1863
    %v1865 = vpop.f32.mrb[0].mxu0
    %v1866 = vpop.f32.mrb[0].mxu0
    %v1867 = vadd.f32 %v1578, %v1866
    %v1868 = vpop.f32.mrb[0].mxu0
    %1869 = vmatprep.mubr.bf16.mxu0 %v1291
    %1870 = vmatmul.mubr.bf16.gmra.mrb[0].mxu0 %v1290
    %v1871 = vpop.f32.mrb[0].mxu0
    %v1872 = vadd.f32 %v1583, %v1871
    %v1873 = vpop.f32.mrb[0].mxu0
    %v1874 = vpop.f32.mrb[0].mxu0
    %v1875 = vadd.f32 %v1586, %v1874
    %v1876 = vpop.f32.mrb[0].mxu0
    %1877 = vmatprep.mubr.bf16.mxu0 %v1295
    %1878 = vmatmul.mubr.bf16.gmra.mrb[0].mxu0 %v1294
    %v1879 = vpop.f32.mrb[0].mxu0
    %v1880 = vadd.f32 %v1591, %v1879
    %v1881 = vpop.f32.mrb[0].mxu0
    %v1882 = vpop.f32.mrb[0].mxu0
    %v1883 = vadd.f32 %v1594, %v1882
    %v1884 = vpop.f32.mrb[0].mxu0
    %1885 = vmatprep.mubr.bf16.mxu0 %v1299
    %1886 = vmatmul.mubr.bf16.gmra.mrb[0].mxu0 %v1298
    %v1887 = vpop.f32.mrb[0].mxu0
    %v1888 = vadd.f32 %v1599, %v1887
    %v1889 = vpop.f32.mrb[0].mxu0
    %v1890 = vpop.f32.mrb[0].mxu0
    %v1891 = vadd.f32 %v1602, %v1890
    %v1892 = vpop.f32.mrb[0].mxu0
    %1893 = vmatprep.mubr.bf16.mxu0 %v1303
    %1894 = vmatmul.mubr.bf16.gmra.mrb[0].mxu0 %v1302
    %v1895 = vpop.f32.mrb[0].mxu0
    %v1896 = vadd.f32 %v1607, %v1895
    %v1897 = vpop.f32.mrb[0].mxu0
    %v1898 = vpop.f32.mrb[0].mxu0
    %v1899 = vadd.f32 %v1610, %v1898
    %v1900 = vpop.f32.mrb[0].mxu0
    %1901 = vmatprep.mubr.bf16.mxu0 %v1307
    %1902 = vmatmul.mubr.bf16.gmra.mrb[0].mxu0 %v1306
    %v1903 = vpop.f32.mrb[0].mxu0
    %v1904 = vadd.f32 %v1615, %v1903
    %v1905 = vpop.f32.mrb[0].mxu0
    %v1906 = vpop.f32.mrb[0].mxu0
    %v1907 = vadd.f32 %v1618, %v1906
    %v1908 = vpop.f32.mrb[0].mxu0
    %1909 = vmatprep.mubr.bf16.mxu0 %v1311
    %1910 = vmatmul.mubr.bf16.gmra.mrb[0].mxu0 %v1310
    %v1911 = vpop.f32.mrb[0].mxu0
    %v1912 = vadd.f32 %v1623, %v1911
    %v1913 = vpop.f32.mrb[0].mxu0
    %v1914 = vpop.f32.mrb[0].mxu0
    %v1915 = vadd.f32 %v1626, %v1914
    %v1916 = vpop.f32.mrb[0].mxu0
    %1917 = vmatprep.mubr.bf16.mxu0 %v1315
    %1918 = vmatmul.mubr.bf16.gmra.mrb[0].mxu0 %v1314
    %v1919 = vpop.f32.mrb[0].mxu0
    %v1920 = vadd.f32 %v1631, %v1919
    %v1921 = vpop.f32.mrb[0].mxu0
    %v1922 = vpop.f32.mrb[0].mxu0
    %v1923 = vadd.f32 %v1634, %v1922
    %v1924 = vpop.f32.mrb[0].mxu0
    %1925 = vmatprep.mubr.bf16.mxu0 %v1319
    %1926 = vmatmul.mubr.bf16.gmra.mrb[0].mxu0 %v1318
    %v1927 = vpop.f32.mrb[0].mxu0
    %v1928 = vadd.f32 %v1639, %v1927
    %v1929 = vpop.f32.mrb[0].mxu0
    %v1930 = vpop.f32.mrb[0].mxu0
    %v1931 = vadd.f32 %v1642, %v1930
    %v1932 = vpop.f32.mrb[0].mxu0
    %1933 = vmatprep.mubr.bf16.mxu0 %v1323
    %1934 = vmatmul.mubr.bf16.gmra.mrb[0].mxu0 %v1322
    %v1935 = vpop.f32.mrb[0].mxu0
    %v1936 = vadd.f32 %v1647, %v1935
    %v1937 = vpop.f32.mrb[0].mxu0
    %v1938 = vpop.f32.mrb[0].mxu0
    %v1939 = vadd.f32 %v1650, %v1938
    %v1940 = vpop.f32.mrb[0].mxu0
    %1941 = vmatprep.mubr.bf16.mxu0 %v1327
    %1942 = vmatmul.mubr.bf16.gmra.mrb[0].mxu0 %v1326
    %v1943 = vpop.f32.mrb[0].mxu0
    %v1944 = vadd.f32 %v1655, %v1943
    %v1945 = vpop.f32.mrb[0].mxu0
    %v1946 = vpop.f32.mrb[0].mxu0
    %v1947 = vadd.f32 %v1658, %v1946
    %v1948 = vpop.f32.mrb[0].mxu0
    %1949 = vmatprep.mubr.bf16.mxu0 %v1331
    %1950 = vmatmul.mubr.bf16.gmra.mrb[0].mxu0 %v1330
    %v1951 = vpop.f32.mrb[0].mxu0
    %v1952 = vadd.f32 %v1663, %v1951
    %v1953 = vpop.f32.mrb[0].mxu0
    %v1954 = vpop.f32.mrb[0].mxu0
    %v1955 = vadd.f32 %v1666, %v1954
    %v1956 = vpop.f32.mrb[0].mxu0
    %1957 = vmatprep.mubr.bf16.mxu0 %v1335
    %1958 = vmatmul.mubr.bf16.gmra.mrb[0].mxu0 %v1334
    %v1959 = vpop.f32.mrb[0].mxu0
    %v1960 = vadd.f32 %v1671, %v1959
    %v1961 = vpop.f32.mrb[0].mxu0
    %v1962 = vpop.f32.mrb[0].mxu0
    %v1963 = vadd.f32 %v1674, %v1962
    %v1964 = vpop.f32.mrb[0].mxu0
    %1965 = vmatprep.mubr.bf16.mxu0 %v1339
    %1966 = vmatmul.mubr.bf16.gmra.mrb[0].mxu0 %v1338
    %v1967 = vpop.f32.mrb[0].mxu0
    %v1968 = vadd.f32 %v1679, %v1967
    %v1969 = vpop.f32.mrb[0].mxu0
    %v1970 = vpop.f32.mrb[0].mxu0
    %v1971 = vadd.f32 %v1682, %v1970
    %v1972 = vpop.f32.mrb[0].mxu0
    %1973 = vmatprep.mubr.bf16.mxu0 %v1343
    %1974 = vmatmul.mubr.bf16.gmra.mrb[0].mxu0 %v1342
    %v1975 = vpop.f32.mrb[0].mxu0
    %v1976 = vadd.f32 %v1687, %v1975
    %v1977 = vpop.f32.mrb[0].mxu0
    %v1978 = vpop.f32.mrb[0].mxu0
    %v1979 = vadd.f32 %v1690, %v1978
    %v1980 = vpop.f32.mrb[0].mxu0
    %1981 = vmatprep.mubr.bf16.mxu0 %v1347
    %1982 = vmatmul.mubr.bf16.gmra.mrb[0].mxu0 %v1346
    %v1983 = vpop.f32.mrb[0].mxu0
    %v1984 = vadd.f32 %v1695, %v1983
    %v1985 = vpop.f32.mrb[0].mxu0
    %v1986 = vpop.f32.mrb[0].mxu0
    %v1987 = vadd.f32 %v1698, %v1986
    %v1988 = vpop.f32.mrb[0].mxu0
    %1989 = vmatprep.mubr.bf16.mxu0 %v1351
    %1990 = vmatmul.mubr.bf16.gmra.mrb[0].mxu0 %v1350
    %v1991 = vpop.f32.mrb[0].mxu0
    %v1992 = vadd.f32 %v1703, %v1991
    %v1993 = vpop.f32.mrb[0].mxu0
    %v1994 = vpop.f32.mrb[0].mxu0
    %v1995 = vadd.f32 %v1706, %v1994
    %v1996 = vpop.f32.mrb[0].mxu0
    %1997 = vmatprep.mubr.bf16.mxu0 %v1355
    %1998 = vmatmul.mubr.bf16.gmra.mrb[0].mxu0 %v1354
    %v1999 = vpop.f32.mrb[0].mxu0
    %v2000 = vadd.f32 %v1711, %v1999
    %v2001 = vpop.f32.mrb[0].mxu0
    %v2002 = vpop.f32.mrb[0].mxu0
    %v2003 = vadd.f32 %v1714, %v2002
    %v2004 = vpop.f32.mrb[0].mxu0
    %2005 = vmatprep.mubr.bf16.mxu0 %v1359
    %2006 = vmatmul.mubr.bf16.gmra.mrb[0].mxu0 %v1358
    %v2007 = vpop.f32.mrb[0].mxu0
    %v2008 = vadd.f32 %v1719, %v2007
    %v2009 = vpop.f32.mrb[0].mxu0
    %v2010 = vpop.f32.mrb[0].mxu0
    %v2011 = vadd.f32 %v1722, %v2010
    %v2012 = vpop.f32.mrb[0].mxu0
    %2013 = vmatprep.mubr.bf16.mxu0 %v1363
    %2014 = vmatmul.mubr.bf16.gmra.mrb[0].mxu0 %v1362
    %v2015 = vpop.f32.mrb[0].mxu0
    %v2016 = vadd.f32 %v1727, %v2015
    %v2017 = vpop.f32.mrb[0].mxu0
    %v2018 = vpop.f32.mrb[0].mxu0
    %v2019 = vadd.f32 %v1730, %v2018
    %v2020 = vpop.f32.mrb[0].mxu0
    %2021 = vmatprep.mubr.bf16.mxu0 %v1367
    %2022 = vmatmul.mubr.bf16.gmra.mrb[0].mxu0 %v1366
    %v2023 = vpop.f32.mrb[0].mxu0
    %v2024 = vadd.f32 %v1735, %v2023
    %v2025 = vpop.f32.mrb[0].mxu0
    %v2026 = vpop.f32.mrb[0].mxu0
    %v2027 = vadd.f32 %v1738, %v2026
    %v2028 = vpop.f32.mrb[0].mxu0
    %2029 = vmatprep.mubr.bf16.mxu0 %v1371
    %2030 = vmatmul.mubr.bf16.gmra.mrb[0].mxu0 %v1370
    %v2031 = vpop.f32.mrb[0].mxu0
    %v2032 = vadd.f32 %v1743, %v2031
    %v2033 = vpop.f32.mrb[0].mxu0
    %v2034 = vpop.f32.mrb[0].mxu0
    %v2035 = vadd.f32 %v1746, %v2034
    %v2036 = vpop.f32.mrb[0].mxu0
    %2037 = vmatprep.mubr.bf16.mxu0 %v1375
    %2038 = vmatmul.mubr.bf16.gmra.mrb[0].mxu0 %v1374
    %v2039 = vpop.f32.mrb[0].mxu0
    %v2040 = vadd.f32 %v1751, %v2039
    %v2041 = vpop.f32.mrb[0].mxu0
    %v2042 = vpop.f32.mrb[0].mxu0
    %v2043 = vadd.f32 %v1754, %v2042
    %v2044 = vpop.f32.mrb[0].mxu0
    %2045 = vmatprep.mubr.bf16.mxu0 %v1379
    %2046 = vmatmul.mubr.bf16.gmra.mrb[0].mxu0 %v1378
    %v2047 = vpop.f32.mrb[0].mxu0
    %v2048 = vadd.f32 %v1759, %v2047
    %v2049 = vpop.f32.mrb[0].mxu0
    %v2050 = vpop.f32.mrb[0].mxu0
    %v2051 = vadd.f32 %v1762, %v2050
    %v2052 = vpop.f32.mrb[0].mxu0
    %2053 = vmatprep.mubr.bf16.mxu0 %v1383
    %2054 = vmatmul.mubr.bf16.gmra.mrb[0].mxu0 %v1382
    %v2055 = vpop.f32.mrb[0].mxu0
    %v2056 = vadd.f32 %v1767, %v2055
    %v2057 = vpop.f32.mrb[0].mxu0
    %v2058 = vpop.f32.mrb[0].mxu0
    %v2059 = vadd.f32 %v1770, %v2058
    %v2060 = vpop.f32.mrb[0].mxu0
    %2061 = vmatprep.mubr.bf16.mxu0 %v1387
    %2062 = vmatmul.mubr.bf16.gmra.mrb[0].mxu0 %v1386
    %v2063 = vpop.f32.mrb[0].mxu0
    %v2064 = vadd.f32 %v1775, %v2063
    %v2065 = vpop.f32.mrb[0].mxu0
    %v2066 = vpop.f32.mrb[0].mxu0
    %v2067 = vadd.f32 %v1778, %v2066
    %v2068 = vpop.f32.mrb[0].mxu0
    %2069 = vmatprep.mubr.bf16.mxu0 %v1391
    %2070 = vmatmul.mubr.bf16.gmra.mrb[0].mxu0 %v1390
    %v2071 = vpop.f32.mrb[0].mxu0
    %v2072 = vadd.f32 %v1783, %v2071
    %v2073 = vpop.f32.mrb[0].mxu0
    %v2074 = vpop.f32.mrb[0].mxu0
    %v2075 = vadd.f32 %v1786, %v2074
    %v2076 = vpop.f32.mrb[0].mxu0
    %2077 = vmatprep.mubr.bf16.mxu0 %v1395
    %2078 = vmatmul.mubr.bf16.gmra.mrb[0].mxu0 %v1394
    %v2079 = vpop.f32.mrb[0].mxu0
    %v2080 = vadd.f32 %v1791, %v2079
    %v2081 = vpop.f32.mrb[0].mxu0
    %v2082 = vpop.f32.mrb[0].mxu0
    %v2083 = vadd.f32 %v1794, %v2082
    %v2084 = vpop.f32.mrb[0].mxu0
    %2085 = vmatprep.mubr.bf16.mxu0 %v1399
    %2086 = vmatmul.mubr.bf16.gmra.mrb[0].mxu0 %v1398
    %v2087 = vpop.f32.mrb[0].mxu0
    %v2088 = vadd.f32 %v1799, %v2087
    %v2089 = vpop.f32.mrb[0].mxu0
    %v2090 = vpop.f32.mrb[0].mxu0
    %v2091 = vadd.f32 %v1802, %v2090
    %v2092 = vpop.f32.mrb[0].mxu0
    %2093 = vmatprep.mubr.bf16.mxu0 %v1403
    %2094 = vmatmul.mubr.bf16.gmra.mrb[0].mxu0 %v1402
    %v2095 = vpop.f32.mrb[0].mxu0
    %v2096 = vadd.f32 %v1807, %v2095
    %v2097 = vpop.f32.mrb[0].mxu0
    %v2098 = vpop.f32.mrb[0].mxu0
    %v2099 = vadd.f32 %v1810, %v2098
    %v2100 = vpop.f32.mrb[0].mxu0
    %2101 = vmatprep.mubr.bf16.mxu0 %v1407
    %2102 = vmatmul.mubr.bf16.gmra.mrb[0].mxu0 %v1406
    %v2103 = vpop.f32.mrb[0].mxu0
    %v2104 = vadd.f32 %v1815, %v2103
    %v2105 = vpop.f32.mrb[0].mxu0
    %v2106 = vpop.f32.mrb[0].mxu0
    %v2107 = vadd.f32 %v1818, %v2106
    %v2108 = vpop.f32.mrb[0].mxu0
    %2109 = vmatprep.mubr.bf16.mxu0 %v1411
    %2110 = vmatmul.mubr.bf16.gmra.mrb[0].mxu0 %v1410
    %v2111 = vpop.f32.mrb[0].mxu0
    %v2112 = vadd.f32 %v1823, %v2111
    %v2113 = vpop.f32.mrb[0].mxu0
    %v2114 = vpop.f32.mrb[0].mxu0
    %v2115 = vadd.f32 %v1826, %v2114
    %v2116 = vpop.f32.mrb[0].mxu0
    %2117 = vdwg.mxu0
    %v2118 = vmul.f32 %v1864, 0.9
    %v2119 = vmul.f32 %v1867, 0.9
    %v2120 = vmul.f32 %v1872, 0.9
    %v2121 = vmul.f32 %v1875, 0.9
    %v2122 = vmul.f32 %v1880, 0.9
    %v2123 = vmul.f32 %v1883, 0.9
    %v2124 = vmul.f32 %v1888, 0.9
    %v2125 = vmul.f32 %v1891, 0.9
    %v2126 = vmul.f32 %v1896, 0.9
    %v2127 = vmul.f32 %v1899, 0.9
    %v2128 = vmul.f32 %v1904, 0.9
    %v2129 = vmul.f32 %v1907, 0.9
    %v2130 = vmul.f32 %v1912, 0.9
    %v2131 = vmul.f32 %v1915, 0.9
    %v2132 = vmul.f32 %v1920, 0.9
    %v2133 = vmul.f32 %v1923, 0.9
    %v2134 = vmul.f32 %v1928, 0.9
    %v2135 = vmul.f32 %v1931, 0.9
    %v2136 = vmul.f32 %v1936, 0.9
    %v2137 = vmul.f32 %v1939, 0.9
    %v2138 = vmul.f32 %v1944, 0.9
    %v2139 = vmul.f32 %v1947, 0.9
    %v2140 = vmul.f32 %v1952, 0.9
    %v2141 = vmul.f32 %v1955, 0.9
    %v2142 = vmul.f32 %v1960, 0.9
    %v2143 = vmul.f32 %v1963, 0.9
    %v2144 = vmul.f32 %v1968, 0.9
    %v2145 = vmul.f32 %v1971, 0.9
    %v2146 = vmul.f32 %v1976, 0.9
    %v2147 = vmul.f32 %v1979, 0.9
    %v2148 = vmul.f32 %v1984, 0.9
    %v2149 = vmul.f32 %v1987, 0.9
    %v2150 = vmul.f32 %v1992, 0.9
    %v2151 = vmul.f32 %v1995, 0.9
    %v2152 = vmul.f32 %v2000, 0.9
    %v2153 = vmul.f32 %v2003, 0.9
    %v2154 = vmul.f32 %v2008, 0.9
    %v2155 = vmul.f32 %v2011, 0.9
    %v2156 = vmul.f32 %v2016, 0.9
    %v2157 = vmul.f32 %v2019, 0.9
    %v2158 = vmul.f32 %v2024, 0.9
    %v2159 = vmul.f32 %v2027, 0.9
    %v2160 = vmul.f32 %v2032, 0.9
    %v2161 = vmul.f32 %v2035, 0.9
    %v2162 = vmul.f32 %v2040, 0.9
    %v2163 = vmul.f32 %v2043, 0.9
    %v2164 = vmul.f32 %v2048, 0.9
    %v2165 = vmul.f32 %v2051, 0.9
    %v2166 = vmul.f32 %v2056, 0.9
    %v2167 = vmul.f32 %v2059, 0.9
    %v2168 = vmul.f32 %v2064, 0.9
    %v2169 = vmul.f32 %v2067, 0.9
    %v2170 = vmul.f32 %v2072, 0.9
    %v2171 = vmul.f32 %v2075, 0.9
    %v2172 = vmul.f32 %v2080, 0.9
    %v2173 = vmul.f32 %v2083, 0.9
    %v2174 = vmul.f32 %v2088, 0.9
    %v2175 = vmul.f32 %v2091, 0.9
    %v2176 = vmul.f32 %v2096, 0.9
    %v2177 = vmul.f32 %v2099, 0.9
    %v2178 = vmul.f32 %v2104, 0.9
    %v2179 = vmul.f32 %v2107, 0.9
    %v2180 = vmul.f32 %v2112, 0.9
    %v2181 = vmul.f32 %v2115, 0.9
    %v2182 = vadd.f32 %v2118, %v676
    %v2183 = vadd.f32 %v2119, %v677
    %v2184 = vadd.f32 %v2120, %v678
    %v2185 = vadd.f32 %v2121, %v679
    %v2186 = vadd.f32 %v2122, %v680
    %v2187 = vadd.f32 %v2123, %v681
    %v2188 = vadd.f32 %v2124, %v682
    %v2189 = vadd.f32 %v2125, %v683
    %v2190 = vadd.f32 %v2126, %v684
    %v2191 = vadd.f32 %v2127, %v685
    %v2192 = vadd.f32 %v2128, %v686
    %v2193 = vadd.f32 %v2129, %v687
    %v2194 = vadd.f32 %v2130, %v688
    %v2195 = vadd.f32 %v2131, %v689
    %v2196 = vadd.f32 %v2132, %v690
    %v2197 = vadd.f32 %v2133, %v691
    %v2198 = vadd.f32 %v2134, %v692
    %v2199 = vadd.f32 %v2135, %v693
    %v2200 = vadd.f32 %v2136, %v694
    %v2201 = vadd.f32 %v2137, %v695
    %v2202 = vadd.f32 %v2138, %v696
    %v2203 = vadd.f32 %v2139, %v697
    %v2204 = vadd.f32 %v2140, %v698
    %v2205 = vadd.f32 %v2141, %v699
    %v2206 = vadd.f32 %v2142, %v700
    %v2207 = vadd.f32 %v2143, %v701
    %v2208 = vadd.f32 %v2144, %v702
    %v2209 = vadd.f32 %v2145, %v703
    %v2210 = vadd.f32 %v2146, %v704
    %v2211 = vadd.f32 %v2147, %v705
    %v2212 = vadd.f32 %v2148, %v706
    %v2213 = vadd.f32 %v2149, %v707
    %v2214 = vadd.f32 %v2150, %v708
    %v2215 = vadd.f32 %v2151, %v709
    %v2216 = vadd.f32 %v2152, %v710
    %v2217 = vadd.f32 %v2153, %v711
    %v2218 = vadd.f32 %v2154, %v712
    %v2219 = vadd.f32 %v2155, %v713
    %v2220 = vadd.f32 %v2156, %v714
    %v2221 = vadd.f32 %v2157, %v715
    %v2222 = vadd.f32 %v2158, %v716
    %v2223 = vadd.f32 %v2159, %v717
    %v2224 = vadd.f32 %v2160, %v718
    %v2225 = vadd.f32 %v2161, %v719
    %v2226 = vadd.f32 %v2162, %v720
    %v2227 = vadd.f32 %v2163, %v721
    %v2228 = vadd.f32 %v2164, %v722
    %v2229 = vadd.f32 %v2165, %v723
    %v2230 = vadd.f32 %v2166, %v724
    %v2231 = vadd.f32 %v2167, %v725
    %v2232 = vadd.f32 %v2168, %v726
    %v2233 = vadd.f32 %v2169, %v727
    %v2234 = vadd.f32 %v2170, %v728
    %v2235 = vadd.f32 %v2171, %v729
    %v2236 = vadd.f32 %v2172, %v730
    %v2237 = vadd.f32 %v2173, %v731
    %v2238 = vadd.f32 %v2174, %v732
    %v2239 = vadd.f32 %v2175, %v733
    %v2240 = vadd.f32 %v2176, %v734
    %v2241 = vadd.f32 %v2177, %v735
    %v2242 = vadd.f32 %v2178, %v736
    %v2243 = vadd.f32 %v2179, %v737
    %v2244 = vadd.f32 %v2180, %v738
    %v2245 = vadd.f32 %v2181, %v739
    %v2246 = vpack.c.bf16 %v2183, %v2182
    %v2247 = vpack.c.bf16 %v2185, %v2184
    %v2248 = vpack.c.bf16 %v2187, %v2186
    %v2249 = vpack.c.bf16 %v2189, %v2188
    %v2250 = vpack.c.bf16 %v2191, %v2190
    %v2251 = vpack.c.bf16 %v2193, %v2192
    %v2252 = vpack.c.bf16 %v2195, %v2194
    %v2253 = vpack.c.bf16 %v2197, %v2196
    %v2254 = vpack.c.bf16 %v2199, %v2198
    %v2255 = vpack.c.bf16 %v2201, %v2200
    %v2256 = vpack.c.bf16 %v2203, %v2202
    %v2257 = vpack.c.bf16 %v2205, %v2204
    %v2258 = vpack.c.bf16 %v2207, %v2206
    %v2259 = vpack.c.bf16 %v2209, %v2208
    %v2260 = vpack.c.bf16 %v2211, %v2210
    %v2261 = vpack.c.bf16 %v2213, %v2212
    %v2262 = vpack.c.bf16 %v2215, %v2214
    %v2263 = vpack.c.bf16 %v2217, %v2216
    %v2264 = vpack.c.bf16 %v2219, %v2218
    %v2265 = vpack.c.bf16 %v2221, %v2220
    %v2266 = vpack.c.bf16 %v2223, %v2222
    %v2267 = vpack.c.bf16 %v2225, %v2224
    %v2268 = vpack.c.bf16 %v2227, %v2226
    %v2269 = vpack.c.bf16 %v2229, %v2228
    %v2270 = vpack.c.bf16 %v2231, %v2230
    %v2271 = vpack.c.bf16 %v2233, %v2232
    %v2272 = vpack.c.bf16 %v2235, %v2234
    %v2273 = vpack.c.bf16 %v2237, %v2236
    %v2274 = vpack.c.bf16 %v2239, %v2238
    %v2275 = vpack.c.bf16 %v2241, %v2240
    %v2276 = vpack.c.bf16 %v2243, %v2242
    %v2277 = vpack.c.bf16 %v2245, %v2244
    %2278 = vmatprep.subr.bf16.mxu0 0
    %2279 = vmatpush1.bf16.msra.mxu0 %v2246
    %2280 = vmatprep.subr.bf16.mxu0 0
    %2281 = vmatpush1.bf16.msra.mxu0 %v2247
    %2282 = vmatprep.subr.bf16.mxu0 0
    %2283 = vmatpush1.bf16.msra.mxu0 %v2248
    %2284 = vmatprep.subr.bf16.mxu0 0
    %2285 = vmatpush1.bf16.msra.mxu0 %v2249
    %2286 = vmatprep.subr.bf16.mxu0 0
    %2287 = vmatpush1.bf16.msra.mxu0 %v2250
    %2288 = vmatprep.subr.bf16.mxu0 0
    %2289 = vmatpush1.bf16.msra.mxu0 %v2251
    %2290 = vmatprep.subr.bf16.mxu0 0
    %2291 = vmatpush1.bf16.msra.mxu0 %v2252
    %2292 = vmatprep.subr.bf16.mxu0 0
    %2293 = vmatpush1.bf16.msra.mxu0 %v2253
    %2294 = vmatprep.subr.bf16.mxu0 0
    %2295 = vmatpush1.bf16.msra.mxu0 %v2254
    %2296 = vmatprep.subr.bf16.mxu0 0
    %2297 = vmatpush1.bf16.msra.mxu0 %v2255
    %2298 = vmatprep.subr.bf16.mxu0 0
    %2299 = vmatpush1.bf16.msra.mxu0 %v2256
    %2300 = vmatprep.subr.bf16.mxu0 0
    %2301 = vmatpush1.bf16.msra.mxu0 %v2257
    %2302 = vmatprep.subr.bf16.mxu0 0
    %2303 = vmatpush1.bf16.msra.mxu0 %v2258
    %2304 = vmatprep.subr.bf16.mxu0 0
    %2305 = vmatpush1.bf16.msra.mxu0 %v2259
    %2306 = vmatprep.subr.bf16.mxu0 0
    %2307 = vmatpush1.bf16.msra.mxu0 %v2260
    %2308 = vmatprep.subr.bf16.mxu0 0
    %2309 = vmatpush1.bf16.msra.mxu0 %v2261
    %2310 = vmatprep.mubr.bf16.mxu0 %v1285
    %2311 = vmatmul.mubr.bf16.gmra.mrb[0].mxu0 %v1284
    %v2312 = vpop.f32.mrb[0].mxu0
    %v2313 = vadd.f32 0.0, %v2312
    %v2314 = vpop.f32.mrb[0].mxu0
    %v2315 = vpop.f32.mrb[0].mxu0
    %v2316 = vadd.f32 0.0, %v2315
    %v2317 = vpop.f32.mrb[0].mxu0
    %2318 = vmatprep.mubr.bf16.mxu0 %v1289
    %2319 = vmatmul.mubr.bf16.gmra.mrb[0].mxu0 %v1288
    %v2320 = vpop.f32.mrb[0].mxu0
    %v2321 = vadd.f32 0.0, %v2320
    %v2322 = vpop.f32.mrb[0].mxu0
    %v2323 = vpop.f32.mrb[0].mxu0
    %v2324 = vadd.f32 0.0, %v2323
    %v2325 = vpop.f32.mrb[0].mxu0
    %2326 = vmatprep.mubr.bf16.mxu0 %v1293
    %2327 = vmatmul.mubr.bf16.gmra.mrb[0].mxu0 %v1292
    %v2328 = vpop.f32.mrb[0].mxu0
    %v2329 = vadd.f32 0.0, %v2328
    %v2330 = vpop.f32.mrb[0].mxu0
    %v2331 = vpop.f32.mrb[0].mxu0
    %v2332 = vadd.f32 0.0, %v2331
    %v2333 = vpop.f32.mrb[0].mxu0
    %2334 = vmatprep.mubr.bf16.mxu0 %v1297
    %2335 = vmatmul.mubr.bf16.gmra.mrb[0].mxu0 %v1296
    %v2336 = vpop.f32.mrb[0].mxu0
    %v2337 = vadd.f32 0.0, %v2336
    %v2338 = vpop.f32.mrb[0].mxu0
    %v2339 = vpop.f32.mrb[0].mxu0
    %v2340 = vadd.f32 0.0, %v2339
    %v2341 = vpop.f32.mrb[0].mxu0
    %2342 = vmatprep.mubr.bf16.mxu0 %v1301
    %2343 = vmatmul.mubr.bf16.gmra.mrb[0].mxu0 %v1300
    %v2344 = vpop.f32.mrb[0].mxu0
    %v2345 = vadd.f32 0.0, %v2344
    %v2346 = vpop.f32.mrb[0].mxu0
    %v2347 = vpop.f32.mrb[0].mxu0
    %v2348 = vadd.f32 0.0, %v2347
    %v2349 = vpop.f32.mrb[0].mxu0
    %2350 = vmatprep.mubr.bf16.mxu0 %v1305
    %2351 = vmatmul.mubr.bf16.gmra.mrb[0].mxu0 %v1304
    %v2352 = vpop.f32.mrb[0].mxu0
    %v2353 = vadd.f32 0.0, %v2352
    %v2354 = vpop.f32.mrb[0].mxu0
    %v2355 = vpop.f32.mrb[0].mxu0
    %v2356 = vadd.f32 0.0, %v2355
    %v2357 = vpop.f32.mrb[0].mxu0
    %2358 = vmatprep.mubr.bf16.mxu0 %v1309
    %2359 = vmatmul.mubr.bf16.gmra.mrb[0].mxu0 %v1308
    %v2360 = vpop.f32.mrb[0].mxu0
    %v2361 = vadd.f32 0.0, %v2360
    %v2362 = vpop.f32.mrb[0].mxu0
    %v2363 = vpop.f32.mrb[0].mxu0
    %v2364 = vadd.f32 0.0, %v2363
    %v2365 = vpop.f32.mrb[0].mxu0
    %2366 = vmatprep.mubr.bf16.mxu0 %v1313
    %2367 = vmatmul.mubr.bf16.gmra.mrb[0].mxu0 %v1312
    %v2368 = vpop.f32.mrb[0].mxu0
    %v2369 = vadd.f32 0.0, %v2368
    %v2370 = vpop.f32.mrb[0].mxu0
    %v2371 = vpop.f32.mrb[0].mxu0
    %v2372 = vadd.f32 0.0, %v2371
    %v2373 = vpop.f32.mrb[0].mxu0
    %2374 = vmatprep.mubr.bf16.mxu0 %v1317
    %2375 = vmatmul.mubr.bf16.gmra.mrb[0].mxu0 %v1316
    %v2376 = vpop.f32.mrb[0].mxu0
    %v2377 = vadd.f32 0.0, %v2376
    %v2378 = vpop.f32.mrb[0].mxu0
    %v2379 = vpop.f32.mrb[0].mxu0
    %v2380 = vadd.f32 0.0, %v2379
    %v2381 = vpop.f32.mrb[0].mxu0
    %2382 = vmatprep.mubr.bf16.mxu0 %v1321
    %2383 = vmatmul.mubr.bf16.gmra.mrb[0].mxu0 %v1320
    %v2384 = vpop.f32.mrb[0].mxu0
    %v2385 = vadd.f32 0.0, %v2384
    %v2386 = vpop.f32.mrb[0].mxu0
    %v2387 = vpop.f32.mrb[0].mxu0
    %v2388 = vadd.f32 0.0, %v2387
    %v2389 = vpop.f32.mrb[0].mxu0
    %2390 = vmatprep.mubr.bf16.mxu0 %v1325
    %2391 = vmatmul.mubr.bf16.gmra.mrb[0].mxu0 %v1324
    %v2392 = vpop.f32.mrb[0].mxu0
    %v2393 = vadd.f32 0.0, %v2392
    %v2394 = vpop.f32.mrb[0].mxu0
    %v2395 = vpop.f32.mrb[0].mxu0
    %v2396 = vadd.f32 0.0, %v2395
    %v2397 = vpop.f32.mrb[0].mxu0
    %2398 = vmatprep.mubr.bf16.mxu0 %v1329
    %2399 = vmatmul.mubr.bf16.gmra.mrb[0].mxu0 %v1328
    %v2400 = vpop.f32.mrb[0].mxu0
    %v2401 = vadd.f32 0.0, %v2400
    %v2402 = vpop.f32.mrb[0].mxu0
    %v2403 = vpop.f32.mrb[0].mxu0
    %v2404 = vadd.f32 0.0, %v2403
    %v2405 = vpop.f32.mrb[0].mxu0
    %2406 = vmatprep.mubr.bf16.mxu0 %v1333
    %2407 = vmatmul.mubr.bf16.gmra.mrb[0].mxu0 %v1332
    %v2408 = vpop.f32.mrb[0].mxu0
    %v2409 = vadd.f32 0.0, %v2408
    %v2410 = vpop.f32.mrb[0].mxu0
    %v2411 = vpop.f32.mrb[0].mxu0
    %v2412 = vadd.f32 0.0, %v2411
    %v2413 = vpop.f32.mrb[0].mxu0
    %2414 = vmatprep.mubr.bf16.mxu0 %v1337
    %2415 = vmatmul.mubr.bf16.gmra.mrb[0].mxu0 %v1336
    %v2416 = vpop.f32.mrb[0].mxu0
    %v2417 = vadd.f32 0.0, %v2416
    %v2418 = vpop.f32.mrb[0].mxu0
    %v2419 = vpop.f32.mrb[0].mxu0
    %v2420 = vadd.f32 0.0, %v2419
    %v2421 = vpop.f32.mrb[0].mxu0
    %2422 = vmatprep.mubr.bf16.mxu0 %v1341
    %2423 = vmatmul.mubr.bf16.gmra.mrb[0].mxu0 %v1340
    %v2424 = vpop.f32.mrb[0].mxu0
    %v2425 = vadd.f32 0.0, %v2424
    %v2426 = vpop.f32.mrb[0].mxu0
    %v2427 = vpop.f32.mrb[0].mxu0
    %v2428 = vadd.f32 0.0, %v2427
    %v2429 = vpop.f32.mrb[0].mxu0
    %2430 = vmatprep.mubr.bf16.mxu0 %v1345
    %2431 = vmatmul.mubr.bf16.gmra.mrb[0].mxu0 %v1344
    %v2432 = vpop.f32.mrb[0].mxu0
    %v2433 = vadd.f32 0.0, %v2432
    %v2434 = vpop.f32.mrb[0].mxu0
    %v2435 = vpop.f32.mrb[0].mxu0
    %v2436 = vadd.f32 0.0, %v2435
    %v2437 = vpop.f32.mrb[0].mxu0
    %2438 = vmatprep.mubr.bf16.mxu0 %v1349
    %2439 = vmatmul.mubr.bf16.gmra.mrb[0].mxu0 %v1348
    %v2440 = vpop.f32.mrb[0].mxu0
    %v2441 = vadd.f32 0.0, %v2440
    %v2442 = vpop.f32.mrb[0].mxu0
    %v2443 = vpop.f32.mrb[0].mxu0
    %v2444 = vadd.f32 0.0, %v2443
    %v2445 = vpop.f32.mrb[0].mxu0
    %2446 = vmatprep.mubr.bf16.mxu0 %v1353
    %2447 = vmatmul.mubr.bf16.gmra.mrb[0].mxu0 %v1352
    %v2448 = vpop.f32.mrb[0].mxu0
    %v2449 = vadd.f32 0.0, %v2448
    %v2450 = vpop.f32.mrb[0].mxu0
    %v2451 = vpop.f32.mrb[0].mxu0
    %v2452 = vadd.f32 0.0, %v2451
    %v2453 = vpop.f32.mrb[0].mxu0
    %2454 = vmatprep.mubr.bf16.mxu0 %v1357
    %2455 = vmatmul.mubr.bf16.gmra.mrb[0].mxu0 %v1356
    %v2456 = vpop.f32.mrb[0].mxu0
    %v2457 = vadd.f32 0.0, %v2456
    %v2458 = vpop.f32.mrb[0].mxu0
    %v2459 = vpop.f32.mrb[0].mxu0
    %v2460 = vadd.f32 0.0, %v2459
    %v2461 = vpop.f32.mrb[0].mxu0
    %2462 = vmatprep.mubr.bf16.mxu0 %v1361
    %2463 = vmatmul.mubr.bf16.gmra.mrb[0].mxu0 %v1360
    %v2464 = vpop.f32.mrb[0].mxu0
    %v2465 = vadd.f32 0.0, %v2464
    %v2466 = vpop.f32.mrb[0].mxu0
    %v2467 = vpop.f32.mrb[0].mxu0
    %v2468 = vadd.f32 0.0, %v2467
    %v2469 = vpop.f32.mrb[0].mxu0
    %2470 = vmatprep.mubr.bf16.mxu0 %v1365
    %2471 = vmatmul.mubr.bf16.gmra.mrb[0].mxu0 %v1364
    %v2472 = vpop.f32.mrb[0].mxu0
    %v2473 = vadd.f32 0.0, %v2472
    %v2474 = vpop.f32.mrb[0].mxu0
    %v2475 = vpop.f32.mrb[0].mxu0
    %v2476 = vadd.f32 0.0, %v2475
    %v2477 = vpop.f32.mrb[0].mxu0
    %2478 = vmatprep.mubr.bf16.mxu0 %v1369
    %2479 = vmatmul.mubr.bf16.gmra.mrb[0].mxu0 %v1368
    %v2480 = vpop.f32.mrb[0].mxu0
    %v2481 = vadd.f32 0.0, %v2480
    %v2482 = vpop.f32.mrb[0].mxu0
    %v2483 = vpop.f32.mrb[0].mxu0
    %v2484 = vadd.f32 0.0, %v2483
    %v2485 = vpop.f32.mrb[0].mxu0
    %2486 = vmatprep.mubr.bf16.mxu0 %v1373
    %2487 = vmatmul.mubr.bf16.gmra.mrb[0].mxu0 %v1372
    %v2488 = vpop.f32.mrb[0].mxu0
    %v2489 = vadd.f32 0.0, %v2488
    %v2490 = vpop.f32.mrb[0].mxu0
    %v2491 = vpop.f32.mrb[0].mxu0
    %v2492 = vadd.f32 0.0, %v2491
    %v2493 = vpop.f32.mrb[0].mxu0
    %2494 = vmatprep.mubr.bf16.mxu0 %v1377
    %2495 = vmatmul.mubr.bf16.gmra.mrb[0].mxu0 %v1376
    %v2496 = vpop.f32.mrb[0].mxu0
    %v2497 = vadd.f32 0.0, %v2496
    %v2498 = vpop.f32.mrb[0].mxu0
    %v2499 = vpop.f32.mrb[0].mxu0
    %v2500 = vadd.f32 0.0, %v2499
    %v2501 = vpop.f32.mrb[0].mxu0
    %2502 = vmatprep.mubr.bf16.mxu0 %v1381
    %2503 = vmatmul.mubr.bf16.gmra.mrb[0].mxu0 %v1380
    %v2504 = vpop.f32.mrb[0].mxu0
    %v2505 = vadd.f32 0.0, %v2504
    %v2506 = vpop.f32.mrb[0].mxu0
    %v2507 = vpop.f32.mrb[0].mxu0
    %v2508 = vadd.f32 0.0, %v2507
    %v2509 = vpop.f32.mrb[0].mxu0
    %2510 = vmatprep.mubr.bf16.mxu0 %v1385
    %2511 = vmatmul.mubr.bf16.gmra.mrb[0].mxu0 %v1384
    %v2512 = vpop.f32.mrb[0].mxu0
    %v2513 = vadd.f32 0.0, %v2512
    %v2514 = vpop.f32.mrb[0].mxu0
    %v2515 = vpop.f32.mrb[0].mxu0
    %v2516 = vadd.f32 0.0, %v2515
    %v2517 = vpop.f32.mrb[0].mxu0
    %2518 = vmatprep.mubr.bf16.mxu0 %v1389
    %2519 = vmatmul.mubr.bf16.gmra.mrb[0].mxu0 %v1388
    %v2520 = vpop.f32.mrb[0].mxu0
    %v2521 = vadd.f32 0.0, %v2520
    %v2522 = vpop.f32.mrb[0].mxu0
    %v2523 = vpop.f32.mrb[0].mxu0
    %v2524 = vadd.f32 0.0, %v2523
    %v2525 = vpop.f32.mrb[0].mxu0
    %2526 = vmatprep.mubr.bf16.mxu0 %v1393
    %2527 = vmatmul.mubr.bf16.gmra.mrb[0].mxu0 %v1392
    %v2528 = vpop.f32.mrb[0].mxu0
    %v2529 = vadd.f32 0.0, %v2528
    %v2530 = vpop.f32.mrb[0].mxu0
    %v2531 = vpop.f32.mrb[0].mxu0
    %v2532 = vadd.f32 0.0, %v2531
    %v2533 = vpop.f32.mrb[0].mxu0
    %2534 = vmatprep.mubr.bf16.mxu0 %v1397
    %2535 = vmatmul.mubr.bf16.gmra.mrb[0].mxu0 %v1396
    %v2536 = vpop.f32.mrb[0].mxu0
    %v2537 = vadd.f32 0.0, %v2536
    %v2538 = vpop.f32.mrb[0].mxu0
    %v2539 = vpop.f32.mrb[0].mxu0
    %v2540 = vadd.f32 0.0, %v2539
    %v2541 = vpop.f32.mrb[0].mxu0
    %2542 = vmatprep.mubr.bf16.mxu0 %v1401
    %2543 = vmatmul.mubr.bf16.gmra.mrb[0].mxu0 %v1400
    %v2544 = vpop.f32.mrb[0].mxu0
    %v2545 = vadd.f32 0.0, %v2544
    %v2546 = vpop.f32.mrb[0].mxu0
    %v2547 = vpop.f32.mrb[0].mxu0
    %v2548 = vadd.f32 0.0, %v2547
    %v2549 = vpop.f32.mrb[0].mxu0
    %2550 = vmatprep.mubr.bf16.mxu0 %v1405
    %2551 = vmatmul.mubr.bf16.gmra.mrb[0].mxu0 %v1404
    %v2552 = vpop.f32.mrb[0].mxu0
    %v2553 = vadd.f32 0.0, %v2552
    %v2554 = vpop.f32.mrb[0].mxu0
    %v2555 = vpop.f32.mrb[0].mxu0
    %v2556 = vadd.f32 0.0, %v2555
    %v2557 = vpop.f32.mrb[0].mxu0
    %2558 = vmatprep.mubr.bf16.mxu0 %v1409
    %2559 = vmatmul.mubr.bf16.gmra.mrb[0].mxu0 %v1408
    %v2560 = vpop.f32.mrb[0].mxu0
    %v2561 = vadd.f32 0.0, %v2560
    %v2562 = vpop.f32.mrb[0].mxu0
    %v2563 = vpop.f32.mrb[0].mxu0
    %v2564 = vadd.f32 0.0, %v2563
    %v2565 = vpop.f32.mrb[0].mxu0
    %2566 = vdwg.mxu0
    %2567 = vmatprep.subr.bf16.mxu0 0
    %2568 = vmatpush1.bf16.msra.mxu0 %v2262
    %2569 = vmatprep.subr.bf16.mxu0 0
    %2570 = vmatpush1.bf16.msra.mxu0 %v2263
    %2571 = vmatprep.subr.bf16.mxu0 0
    %2572 = vmatpush1.bf16.msra.mxu0 %v2264
    %2573 = vmatprep.subr.bf16.mxu0 0
    %2574 = vmatpush1.bf16.msra.mxu0 %v2265
    %2575 = vmatprep.subr.bf16.mxu0 0
    %2576 = vmatpush1.bf16.msra.mxu0 %v2266
    %2577 = vmatprep.subr.bf16.mxu0 0
    %2578 = vmatpush1.bf16.msra.mxu0 %v2267
    %2579 = vmatprep.subr.bf16.mxu0 0
    %2580 = vmatpush1.bf16.msra.mxu0 %v2268
    %2581 = vmatprep.subr.bf16.mxu0 0
    %2582 = vmatpush1.bf16.msra.mxu0 %v2269
    %2583 = vmatprep.subr.bf16.mxu0 0
    %2584 = vmatpush1.bf16.msra.mxu0 %v2270
    %2585 = vmatprep.subr.bf16.mxu0 0
    %2586 = vmatpush1.bf16.msra.mxu0 %v2271
    %2587 = vmatprep.subr.bf16.mxu0 0
    %2588 = vmatpush1.bf16.msra.mxu0 %v2272
    %2589 = vmatprep.subr.bf16.mxu0 0
    %2590 = vmatpush1.bf16.msra.mxu0 %v2273
    %2591 = vmatprep.subr.bf16.mxu0 0
    %2592 = vmatpush1.bf16.msra.mxu0 %v2274
    %2593 = vmatprep.subr.bf16.mxu0 0
    %2594 = vmatpush1.bf16.msra.mxu0 %v2275
    %2595 = vmatprep.subr.bf16.mxu0 0
    %2596 = vmatpush1.bf16.msra.mxu0 %v2276
    %2597 = vmatprep.subr.bf16.mxu0 0
    %2598 = vmatpush1.bf16.msra.mxu0 %v2277
    %2599 = vmatprep.mubr.bf16.mxu0 %v1287
    %2600 = vmatmul.mubr.bf16.gmra.mrb[0].mxu0 %v1286
    %v2601 = vpop.f32.mrb[0].mxu0
    %v2602 = vadd.f32 %v2313, %v2601
    %v2603 = vpop.f32.mrb[0].mxu0
    %v2604 = vpop.f32.mrb[0].mxu0
    %v2605 = vadd.f32 %v2316, %v2604
    %v2606 = vpop.f32.mrb[0].mxu0
    %2607 = vmatprep.mubr.bf16.mxu0 %v1291
    %2608 = vmatmul.mubr.bf16.gmra.mrb[0].mxu0 %v1290
    %v2609 = vpop.f32.mrb[0].mxu0
    %v2610 = vadd.f32 %v2321, %v2609
    %v2611 = vpop.f32.mrb[0].mxu0
    %v2612 = vpop.f32.mrb[0].mxu0
    %v2613 = vadd.f32 %v2324, %v2612
    %v2614 = vpop.f32.mrb[0].mxu0
    %2615 = vmatprep.mubr.bf16.mxu0 %v1295
    %2616 = vmatmul.mubr.bf16.gmra.mrb[0].mxu0 %v1294
    %v2617 = vpop.f32.mrb[0].mxu0
    %v2618 = vadd.f32 %v2329, %v2617
    %v2619 = vpop.f32.mrb[0].mxu0
    %v2620 = vpop.f32.mrb[0].mxu0
    %v2621 = vadd.f32 %v2332, %v2620
    %v2622 = vpop.f32.mrb[0].mxu0
    %2623 = vmatprep.mubr.bf16.mxu0 %v1299
    %2624 = vmatmul.mubr.bf16.gmra.mrb[0].mxu0 %v1298
    %v2625 = vpop.f32.mrb[0].mxu0
    %v2626 = vadd.f32 %v2337, %v2625
    %v2627 = vpop.f32.mrb[0].mxu0
    %v2628 = vpop.f32.mrb[0].mxu0
    %v2629 = vadd.f32 %v2340, %v2628
    %v2630 = vpop.f32.mrb[0].mxu0
    %2631 = vmatprep.mubr.bf16.mxu0 %v1303
    %2632 = vmatmul.mubr.bf16.gmra.mrb[0].mxu0 %v1302
    %v2633 = vpop.f32.mrb[0].mxu0
    %v2634 = vadd.f32 %v2345, %v2633
    %v2635 = vpop.f32.mrb[0].mxu0
    %v2636 = vpop.f32.mrb[0].mxu0
    %v2637 = vadd.f32 %v2348, %v2636
    %v2638 = vpop.f32.mrb[0].mxu0
    %2639 = vmatprep.mubr.bf16.mxu0 %v1307
    %2640 = vmatmul.mubr.bf16.gmra.mrb[0].mxu0 %v1306
    %v2641 = vpop.f32.mrb[0].mxu0
    %v2642 = vadd.f32 %v2353, %v2641
    %v2643 = vpop.f32.mrb[0].mxu0
    %v2644 = vpop.f32.mrb[0].mxu0
    %v2645 = vadd.f32 %v2356, %v2644
    %v2646 = vpop.f32.mrb[0].mxu0
    %2647 = vmatprep.mubr.bf16.mxu0 %v1311
    %2648 = vmatmul.mubr.bf16.gmra.mrb[0].mxu0 %v1310
    %v2649 = vpop.f32.mrb[0].mxu0
    %v2650 = vadd.f32 %v2361, %v2649
    %v2651 = vpop.f32.mrb[0].mxu0
    %v2652 = vpop.f32.mrb[0].mxu0
    %v2653 = vadd.f32 %v2364, %v2652
    %v2654 = vpop.f32.mrb[0].mxu0
    %2655 = vmatprep.mubr.bf16.mxu0 %v1315
    %2656 = vmatmul.mubr.bf16.gmra.mrb[0].mxu0 %v1314
    %v2657 = vpop.f32.mrb[0].mxu0
    %v2658 = vadd.f32 %v2369, %v2657
    %v2659 = vpop.f32.mrb[0].mxu0
    %v2660 = vpop.f32.mrb[0].mxu0
    %v2661 = vadd.f32 %v2372, %v2660
    %v2662 = vpop.f32.mrb[0].mxu0
    %2663 = vmatprep.mubr.bf16.mxu0 %v1319
    %2664 = vmatmul.mubr.bf16.gmra.mrb[0].mxu0 %v1318
    %v2665 = vpop.f32.mrb[0].mxu0
    %v2666 = vadd.f32 %v2377, %v2665
    %v2667 = vpop.f32.mrb[0].mxu0
    %v2668 = vpop.f32.mrb[0].mxu0
    %v2669 = vadd.f32 %v2380, %v2668
    %v2670 = vpop.f32.mrb[0].mxu0
    %2671 = vmatprep.mubr.bf16.mxu0 %v1323
    %2672 = vmatmul.mubr.bf16.gmra.mrb[0].mxu0 %v1322
    %v2673 = vpop.f32.mrb[0].mxu0
    %v2674 = vadd.f32 %v2385, %v2673
    %v2675 = vpop.f32.mrb[0].mxu0
    %v2676 = vpop.f32.mrb[0].mxu0
    %v2677 = vadd.f32 %v2388, %v2676
    %v2678 = vpop.f32.mrb[0].mxu0
    %2679 = vmatprep.mubr.bf16.mxu0 %v1327
    %2680 = vmatmul.mubr.bf16.gmra.mrb[0].mxu0 %v1326
    %v2681 = vpop.f32.mrb[0].mxu0
    %v2682 = vadd.f32 %v2393, %v2681
    %v2683 = vpop.f32.mrb[0].mxu0
    %v2684 = vpop.f32.mrb[0].mxu0
    %v2685 = vadd.f32 %v2396, %v2684
    %v2686 = vpop.f32.mrb[0].mxu0
    %2687 = vmatprep.mubr.bf16.mxu0 %v1331
    %2688 = vmatmul.mubr.bf16.gmra.mrb[0].mxu0 %v1330
    %v2689 = vpop.f32.mrb[0].mxu0
    %v2690 = vadd.f32 %v2401, %v2689
    %v2691 = vpop.f32.mrb[0].mxu0
    %v2692 = vpop.f32.mrb[0].mxu0
    %v2693 = vadd.f32 %v2404, %v2692
    %v2694 = vpop.f32.mrb[0].mxu0
    %2695 = vmatprep.mubr.bf16.mxu0 %v1335
    %2696 = vmatmul.mubr.bf16.gmra.mrb[0].mxu0 %v1334
    %v2697 = vpop.f32.mrb[0].mxu0
    %v2698 = vadd.f32 %v2409, %v2697
    %v2699 = vpop.f32.mrb[0].mxu0
    %v2700 = vpop.f32.mrb[0].mxu0
    %v2701 = vadd.f32 %v2412, %v2700
    %v2702 = vpop.f32.mrb[0].mxu0
    %2703 = vmatprep.mubr.bf16.mxu0 %v1339
    %2704 = vmatmul.mubr.bf16.gmra.mrb[0].mxu0 %v1338
    %v2705 = vpop.f32.mrb[0].mxu0
    %v2706 = vadd.f32 %v2417, %v2705
    %v2707 = vpop.f32.mrb[0].mxu0
    %v2708 = vpop.f32.mrb[0].mxu0
    %v2709 = vadd.f32 %v2420, %v2708
    %v2710 = vpop.f32.mrb[0].mxu0
    %2711 = vmatprep.mubr.bf16.mxu0 %v1343
    %2712 = vmatmul.mubr.bf16.gmra.mrb[0].mxu0 %v1342
    %v2713 = vpop.f32.mrb[0].mxu0
    %v2714 = vadd.f32 %v2425, %v2713
    %v2715 = vpop.f32.mrb[0].mxu0
    %v2716 = vpop.f32.mrb[0].mxu0
    %v2717 = vadd.f32 %v2428, %v2716
    %v2718 = vpop.f32.mrb[0].mxu0
    %2719 = vmatprep.mubr.bf16.mxu0 %v1347
    %2720 = vmatmul.mubr.bf16.gmra.mrb[0].mxu0 %v1346
    %v2721 = vpop.f32.mrb[0].mxu0
    %v2722 = vadd.f32 %v2433, %v2721
    %v2723 = vpop.f32.mrb[0].mxu0
    %v2724 = vpop.f32.mrb[0].mxu0
    %v2725 = vadd.f32 %v2436, %v2724
    %v2726 = vpop.f32.mrb[0].mxu0
    %2727 = vmatprep.mubr.bf16.mxu0 %v1351
    %2728 = vmatmul.mubr.bf16.gmra.mrb[0].mxu0 %v1350
    %v2729 = vpop.f32.mrb[0].mxu0
    %v2730 = vadd.f32 %v2441, %v2729
    %v2731 = vpop.f32.mrb[0].mxu0
    %v2732 = vpop.f32.mrb[0].mxu0
    %v2733 = vadd.f32 %v2444, %v2732
    %v2734 = vpop.f32.mrb[0].mxu0
    %2735 = vmatprep.mubr.bf16.mxu0 %v1355
    %2736 = vmatmul.mubr.bf16.gmra.mrb[0].mxu0 %v1354
    %v2737 = vpop.f32.mrb[0].mxu0
    %v2738 = vadd.f32 %v2449, %v2737
    %v2739 = vpop.f32.mrb[0].mxu0
    %v2740 = vpop.f32.mrb[0].mxu0
    %v2741 = vadd.f32 %v2452, %v2740
    %v2742 = vpop.f32.mrb[0].mxu0
    %2743 = vmatprep.mubr.bf16.mxu0 %v1359
    %2744 = vmatmul.mubr.bf16.gmra.mrb[0].mxu0 %v1358
    %v2745 = vpop.f32.mrb[0].mxu0
    %v2746 = vadd.f32 %v2457, %v2745
    %v2747 = vpop.f32.mrb[0].mxu0
    %v2748 = vpop.f32.mrb[0].mxu0
    %v2749 = vadd.f32 %v2460, %v2748
    %v2750 = vpop.f32.mrb[0].mxu0
    %2751 = vmatprep.mubr.bf16.mxu0 %v1363
    %2752 = vmatmul.mubr.bf16.gmra.mrb[0].mxu0 %v1362
    %v2753 = vpop.f32.mrb[0].mxu0
    %v2754 = vadd.f32 %v2465, %v2753
    %v2755 = vpop.f32.mrb[0].mxu0
    %v2756 = vpop.f32.mrb[0].mxu0
    %v2757 = vadd.f32 %v2468, %v2756
    %v2758 = vpop.f32.mrb[0].mxu0
    %2759 = vmatprep.mubr.bf16.mxu0 %v1367
    %2760 = vmatmul.mubr.bf16.gmra.mrb[0].mxu0 %v1366
    %v2761 = vpop.f32.mrb[0].mxu0
    %v2762 = vadd.f32 %v2473, %v2761
    %v2763 = vpop.f32.mrb[0].mxu0
    %v2764 = vpop.f32.mrb[0].mxu0
    %v2765 = vadd.f32 %v2476, %v2764
    %v2766 = vpop.f32.mrb[0].mxu0
    %2767 = vmatprep.mubr.bf16.mxu0 %v1371
    %2768 = vmatmul.mubr.bf16.gmra.mrb[0].mxu0 %v1370
    %v2769 = vpop.f32.mrb[0].mxu0
    %v2770 = vadd.f32 %v2481, %v2769
    %v2771 = vpop.f32.mrb[0].mxu0
    %v2772 = vpop.f32.mrb[0].mxu0
    %v2773 = vadd.f32 %v2484, %v2772
    %v2774 = vpop.f32.mrb[0].mxu0
    %2775 = vmatprep.mubr.bf16.mxu0 %v1375
    %2776 = vmatmul.mubr.bf16.gmra.mrb[0].mxu0 %v1374
    %v2777 = vpop.f32.mrb[0].mxu0
    %v2778 = vadd.f32 %v2489, %v2777
    %v2779 = vpop.f32.mrb[0].mxu0
    %v2780 = vpop.f32.mrb[0].mxu0
    %v2781 = vadd.f32 %v2492, %v2780
    %v2782 = vpop.f32.mrb[0].mxu0
    %2783 = vmatprep.mubr.bf16.mxu0 %v1379
    %2784 = vmatmul.mubr.bf16.gmra.mrb[0].mxu0 %v1378
    %v2785 = vpop.f32.mrb[0].mxu0
    %v2786 = vadd.f32 %v2497, %v2785
    %v2787 = vpop.f32.mrb[0].mxu0
    %v2788 = vpop.f32.mrb[0].mxu0
    %v2789 = vadd.f32 %v2500, %v2788
    %v2790 = vpop.f32.mrb[0].mxu0
    %2791 = vmatprep.mubr.bf16.mxu0 %v1383
    %2792 = vmatmul.mubr.bf16.gmra.mrb[0].mxu0 %v1382
    %v2793 = vpop.f32.mrb[0].mxu0
    %v2794 = vadd.f32 %v2505, %v2793
    %v2795 = vpop.f32.mrb[0].mxu0
    %v2796 = vpop.f32.mrb[0].mxu0
    %v2797 = vadd.f32 %v2508, %v2796
    %v2798 = vpop.f32.mrb[0].mxu0
    %2799 = vmatprep.mubr.bf16.mxu0 %v1387
    %2800 = vmatmul.mubr.bf16.gmra.mrb[0].mxu0 %v1386
    %v2801 = vpop.f32.mrb[0].mxu0
    %v2802 = vadd.f32 %v2513, %v2801
    %v2803 = vpop.f32.mrb[0].mxu0
    %v2804 = vpop.f32.mrb[0].mxu0
    %v2805 = vadd.f32 %v2516, %v2804
    %v2806 = vpop.f32.mrb[0].mxu0
    %2807 = vmatprep.mubr.bf16.mxu0 %v1391
    %2808 = vmatmul.mubr.bf16.gmra.mrb[0].mxu0 %v1390
    %v2809 = vpop.f32.mrb[0].mxu0
    %v2810 = vadd.f32 %v2521, %v2809
    %v2811 = vpop.f32.mrb[0].mxu0
    %v2812 = vpop.f32.mrb[0].mxu0
    %v2813 = vadd.f32 %v2524, %v2812
    %v2814 = vpop.f32.mrb[0].mxu0
    %2815 = vmatprep.mubr.bf16.mxu0 %v1395
    %2816 = vmatmul.mubr.bf16.gmra.mrb[0].mxu0 %v1394
    %v2817 = vpop.f32.mrb[0].mxu0
    %v2818 = vadd.f32 %v2529, %v2817
    %v2819 = vpop.f32.mrb[0].mxu0
    %v2820 = vpop.f32.mrb[0].mxu0
    %v2821 = vadd.f32 %v2532, %v2820
    %v2822 = vpop.f32.mrb[0].mxu0
    %2823 = vmatprep.mubr.bf16.mxu0 %v1399
    %2824 = vmatmul.mubr.bf16.gmra.mrb[0].mxu0 %v1398
    %v2825 = vpop.f32.mrb[0].mxu0
    %v2826 = vadd.f32 %v2537, %v2825
    %v2827 = vpop.f32.mrb[0].mxu0
    %v2828 = vpop.f32.mrb[0].mxu0
    %v2829 = vadd.f32 %v2540, %v2828
    %v2830 = vpop.f32.mrb[0].mxu0
    %2831 = vmatprep.mubr.bf16.mxu0 %v1403
    %2832 = vmatmul.mubr.bf16.gmra.mrb[0].mxu0 %v1402
    %v2833 = vpop.f32.mrb[0].mxu0
    %v2834 = vadd.f32 %v2545, %v2833
    %v2835 = vpop.f32.mrb[0].mxu0
    %v2836 = vpop.f32.mrb[0].mxu0
    %v2837 = vadd.f32 %v2548, %v2836
    %v2838 = vpop.f32.mrb[0].mxu0
    %2839 = vmatprep.mubr.bf16.mxu0 %v1407
    %2840 = vmatmul.mubr.bf16.gmra.mrb[0].mxu0 %v1406
    %v2841 = vpop.f32.mrb[0].mxu0
    %v2842 = vadd.f32 %v2553, %v2841
    %v2843 = vpop.f32.mrb[0].mxu0
    %v2844 = vpop.f32.mrb[0].mxu0
    %v2845 = vadd.f32 %v2556, %v2844
    %v2846 = vpop.f32.mrb[0].mxu0
    %2847 = vmatprep.mubr.bf16.mxu0 %v1411
    %2848 = vmatmul.mubr.bf16.gmra.mrb[0].mxu0 %v1410
    %v2849 = vpop.f32.mrb[0].mxu0
    %v2850 = vadd.f32 %v2561, %v2849
    %v2851 = vpop.f32.mrb[0].mxu0
    %v2852 = vpop.f32.mrb[0].mxu0
    %v2853 = vadd.f32 %v2564, %v2852
    %v2854 = vpop.f32.mrb[0].mxu0
    %2855 = vdwg.mxu0
    %v2856 = vmul.f32 %v2602, 0.9
    %v2857 = vmul.f32 %v2605, 0.9
    %v2858 = vmul.f32 %v2610, 0.9
    %v2859 = vmul.f32 %v2613, 0.9
    %v2860 = vmul.f32 %v2618, 0.9
    %v2861 = vmul.f32 %v2621, 0.9
    %v2862 = vmul.f32 %v2626, 0.9
    %v2863 = vmul.f32 %v2629, 0.9
    %v2864 = vmul.f32 %v2634, 0.9
    %v2865 = vmul.f32 %v2637, 0.9
    %v2866 = vmul.f32 %v2642, 0.9
    %v2867 = vmul.f32 %v2645, 0.9
    %v2868 = vmul.f32 %v2650, 0.9
    %v2869 = vmul.f32 %v2653, 0.9
    %v2870 = vmul.f32 %v2658, 0.9
    %v2871 = vmul.f32 %v2661, 0.9
    %v2872 = vmul.f32 %v2666, 0.9
    %v2873 = vmul.f32 %v2669, 0.9
    %v2874 = vmul.f32 %v2674, 0.9
    %v2875 = vmul.f32 %v2677, 0.9
    %v2876 = vmul.f32 %v2682, 0.9
    %v2877 = vmul.f32 %v2685, 0.9
    %v2878 = vmul.f32 %v2690, 0.9
    %v2879 = vmul.f32 %v2693, 0.9
    %v2880 = vmul.f32 %v2698, 0.9
    %v2881 = vmul.f32 %v2701, 0.9
    %v2882 = vmul.f32 %v2706, 0.9
    %v2883 = vmul.f32 %v2709, 0.9
    %v2884 = vmul.f32 %v2714, 0.9
    %v2885 = vmul.f32 %v2717, 0.9
    %v2886 = vmul.f32 %v2722, 0.9
    %v2887 = vmul.f32 %v2725, 0.9
    %v2888 = vmul.f32 %v2730, 0.9
    %v2889 = vmul.f32 %v2733, 0.9
    %v2890 = vmul.f32 %v2738, 0.9
    %v2891 = vmul.f32 %v2741, 0.9
    %v2892 = vmul.f32 %v2746, 0.9
    %v2893 = vmul.f32 %v2749, 0.9
    %v2894 = vmul.f32 %v2754, 0.9
    %v2895 = vmul.f32 %v2757, 0.9
    %v2896 = vmul.f32 %v2762, 0.9
    %v2897 = vmul.f32 %v2765, 0.9
    %v2898 = vmul.f32 %v2770, 0.9
    %v2899 = vmul.f32 %v2773, 0.9
    %v2900 = vmul.f32 %v2778, 0.9
    %v2901 = vmul.f32 %v2781, 0.9
    %v2902 = vmul.f32 %v2786, 0.9
    %v2903 = vmul.f32 %v2789, 0.9
    %v2904 = vmul.f32 %v2794, 0.9
    %v2905 = vmul.f32 %v2797, 0.9
    %v2906 = vmul.f32 %v2802, 0.9
    %v2907 = vmul.f32 %v2805, 0.9
    %v2908 = vmul.f32 %v2810, 0.9
    %v2909 = vmul.f32 %v2813, 0.9
    %v2910 = vmul.f32 %v2818, 0.9
    %v2911 = vmul.f32 %v2821, 0.9
    %v2912 = vmul.f32 %v2826, 0.9
    %v2913 = vmul.f32 %v2829, 0.9
    %v2914 = vmul.f32 %v2834, 0.9
    %v2915 = vmul.f32 %v2837, 0.9
    %v2916 = vmul.f32 %v2842, 0.9
    %v2917 = vmul.f32 %v2845, 0.9
    %v2918 = vmul.f32 %v2850, 0.9
    %v2919 = vmul.f32 %v2853, 0.9
    %v2920 = vadd.f32 %v2856, %v676
    %v2921 = vadd.f32 %v2857, %v677
    %v2922 = vadd.f32 %v2858, %v678
    %v2923 = vadd.f32 %v2859, %v679
    %v2924 = vadd.f32 %v2860, %v680
    %v2925 = vadd.f32 %v2861, %v681
    %v2926 = vadd.f32 %v2862, %v682
    %v2927 = vadd.f32 %v2863, %v683
    %v2928 = vadd.f32 %v2864, %v684
    %v2929 = vadd.f32 %v2865, %v685
    %v2930 = vadd.f32 %v2866, %v686
    %v2931 = vadd.f32 %v2867, %v687
    %v2932 = vadd.f32 %v2868, %v688
    %v2933 = vadd.f32 %v2869, %v689
    %v2934 = vadd.f32 %v2870, %v690
    %v2935 = vadd.f32 %v2871, %v691
    %v2936 = vadd.f32 %v2872, %v692
    %v2937 = vadd.f32 %v2873, %v693
    %v2938 = vadd.f32 %v2874, %v694
    %v2939 = vadd.f32 %v2875, %v695
    %v2940 = vadd.f32 %v2876, %v696
    %v2941 = vadd.f32 %v2877, %v697
    %v2942 = vadd.f32 %v2878, %v698
    %v2943 = vadd.f32 %v2879, %v699
    %v2944 = vadd.f32 %v2880, %v700
    %v2945 = vadd.f32 %v2881, %v701
    %v2946 = vadd.f32 %v2882, %v702
    %v2947 = vadd.f32 %v2883, %v703
    %v2948 = vadd.f32 %v2884, %v704
    %v2949 = vadd.f32 %v2885, %v705
    %v2950 = vadd.f32 %v2886, %v706
    %v2951 = vadd.f32 %v2887, %v707
    %v2952 = vadd.f32 %v2888, %v708
    %v2953 = vadd.f32 %v2889, %v709
    %v2954 = vadd.f32 %v2890, %v710
    %v2955 = vadd.f32 %v2891, %v711
    %v2956 = vadd.f32 %v2892, %v712
    %v2957 = vadd.f32 %v2893, %v713
    %v2958 = vadd.f32 %v2894, %v714
    %v2959 = vadd.f32 %v2895, %v715
    %v2960 = vadd.f32 %v2896, %v716
    %v2961 = vadd.f32 %v2897, %v717
    %v2962 = vadd.f32 %v2898, %v718
    %v2963 = vadd.f32 %v2899, %v719
    %v2964 = vadd.f32 %v2900, %v720
    %v2965 = vadd.f32 %v2901, %v721
    %v2966 = vadd.f32 %v2902, %v722
    %v2967 = vadd.f32 %v2903, %v723
    %v2968 = vadd.f32 %v2904, %v724
    %v2969 = vadd.f32 %v2905, %v725
    %v2970 = vadd.f32 %v2906, %v726
    %v2971 = vadd.f32 %v2907, %v727
    %v2972 = vadd.f32 %v2908, %v728
    %v2973 = vadd.f32 %v2909, %v729
    %v2974 = vadd.f32 %v2910, %v730
    %v2975 = vadd.f32 %v2911, %v731
    %v2976 = vadd.f32 %v2912, %v732
    %v2977 = vadd.f32 %v2913, %v733
    %v2978 = vadd.f32 %v2914, %v734
    %v2979 = vadd.f32 %v2915, %v735
    %v2980 = vadd.f32 %v2916, %v736
    %v2981 = vadd.f32 %v2917, %v737
    %v2982 = vadd.f32 %v2918, %v738
    %v2983 = vadd.f32 %v2919, %v739
    %2984 = vst [vmem:[#allocation8] sm:$0xff] %v2920
    %2985 = vst [vmem:[#allocation8 + $0x8] sm:$0xff] %v2921
    %2986 = vst [vmem:[#allocation8 + $0x10] sm:$0xff] %v2922
    %2987 = vst [vmem:[#allocation8 + $0x18] sm:$0xff] %v2923
    %2988 = vst [vmem:[#allocation8 + $0x20] sm:$0xff] %v2924
    %2989 = vst [vmem:[#allocation8 + $0x28] sm:$0xff] %v2925
    %2990 = vst [vmem:[#allocation8 + $0x30] sm:$0xff] %v2926
    %2991 = vst [vmem:[#allocation8 + $0x38] sm:$0xff] %v2927
    %2992 = vst [vmem:[#allocation8 + $0x40] sm:$0xff] %v2928
    %2993 = vst [vmem:[#allocation8 + $0x48] sm:$0xff] %v2929
    %2994 = vst [vmem:[#allocation8 + $0x50] sm:$0xff] %v2930
    %2995 = vst [vmem:[#allocation8 + $0x58] sm:$0xff] %v2931
    %2996 = vst [vmem:[#allocation8 + $0x60] sm:$0xff] %v2932
    %2997 = vst [vmem:[#allocation8 + $0x68] sm:$0xff] %v2933
    %2998 = vst [vmem:[#allocation8 + $0x70] sm:$0xff] %v2934
    %2999 = vst [vmem:[#allocation8 + $0x78] sm:$0xff] %v2935
    %3000 = vst [vmem:[#allocation8 + $0x80] sm:$0xff] %v2936
    %3001 = vst [vmem:[#allocation8 + $0x88] sm:$0xff] %v2937
    %3002 = vst [vmem:[#allocation8 + $0x90] sm:$0xff] %v2938
    %3003 = vst [vmem:[#allocation8 + $0x98] sm:$0xff] %v2939
    %3004 = vst [vmem:[#allocation8 + $0xa0] sm:$0xff] %v2940
    %3005 = vst [vmem:[#allocation8 + $0xa8] sm:$0xff] %v2941
    %3006 = vst [vmem:[#allocation8 + $0xb0] sm:$0xff] %v2942
    %3007 = vst [vmem:[#allocation8 + $0xb8] sm:$0xff] %v2943
    %3008 = vst [vmem:[#allocation8 + $0xc0] sm:$0xff] %v2944
    %3009 = vst [vmem:[#allocation8 + $0xc8] sm:$0xff] %v2945
    %3010 = vst [vmem:[#allocation8 + $0xd0] sm:$0xff] %v2946
    %3011 = vst [vmem:[#allocation8 + $0xd8] sm:$0xff] %v2947
    %3012 = vst [vmem:[#allocation8 + $0xe0] sm:$0xff] %v2948
    %3013 = vst [vmem:[#allocation8 + $0xe8] sm:$0xff] %v2949
    %3014 = vst [vmem:[#allocation8 + $0xf0] sm:$0xff] %v2950
    %3015 = vst [vmem:[#allocation8 + $0xf8] sm:$0xff] %v2951
    %3016 = vst [vmem:[#allocation8 + $0x100] sm:$0xff] %v2952
    %3017 = vst [vmem:[#allocation8 + $0x108] sm:$0xff] %v2953
    %3018 = vst [vmem:[#allocation8 + $0x110] sm:$0xff] %v2954
    %3019 = vst [vmem:[#allocation8 + $0x118] sm:$0xff] %v2955
    %3020 = vst [vmem:[#allocation8 + $0x120] sm:$0xff] %v2956
    %3021 = vst [vmem:[#allocation8 + $0x128] sm:$0xff] %v2957
    %3022 = vst [vmem:[#allocation8 + $0x130] sm:$0xff] %v2958
    %3023 = vst [vmem:[#allocation8 + $0x138] sm:$0xff] %v2959
    %3024 = vst [vmem:[#allocation8 + $0x140] sm:$0xff] %v2960
    %3025 = vst [vmem:[#allocation8 + $0x148] sm:$0xff] %v2961
    %3026 = vst [vmem:[#allocation8 + $0x150] sm:$0xff] %v2962
    %3027 = vst [vmem:[#allocation8 + $0x158] sm:$0xff] %v2963
    %3028 = vst [vmem:[#allocation8 + $0x160] sm:$0xff] %v2964
    %3029 = vst [vmem:[#allocation8 + $0x168] sm:$0xff] %v2965
    %3030 = vst [vmem:[#allocation8 + $0x170] sm:$0xff] %v2966
    %3031 = vst [vmem:[#allocation8 + $0x178] sm:$0xff] %v2967
    %3032 = vst [vmem:[#allocation8 + $0x180] sm:$0xff] %v2968
    %3033 = vst [vmem:[#allocation8 + $0x188] sm:$0xff] %v2969
    %3034 = vst [vmem:[#allocation8 + $0x190] sm:$0xff] %v2970
    %3035 = vst [vmem:[#allocation8 + $0x198] sm:$0xff] %v2971
    %3036 = vst [vmem:[#allocation8 + $0x1a0] sm:$0xff] %v2972
    %3037 = vst [vmem:[#allocation8 + $0x1a8] sm:$0xff] %v2973
    %3038 = vst [vmem:[#allocation8 + $0x1b0] sm:$0xff] %v2974
    %3039 = vst [vmem:[#allocation8 + $0x1b8] sm:$0xff] %v2975
    %3040 = vst [vmem:[#allocation8 + $0x1c0] sm:$0xff] %v2976
    %3041 = vst [vmem:[#allocation8 + $0x1c8] sm:$0xff] %v2977
    %3042 = vst [vmem:[#allocation8 + $0x1d0] sm:$0xff] %v2978
    %3043 = vst [vmem:[#allocation8 + $0x1d8] sm:$0xff] %v2979
    %3044 = vst [vmem:[#allocation8 + $0x1e0] sm:$0xff] %v2980
    %3045 = vst [vmem:[#allocation8 + $0x1e8] sm:$0xff] %v2981
    %3046 = vst [vmem:[#allocation8 + $0x1f0] sm:$0xff] %v2982
    %3047 = vst [vmem:[#allocation8 + $0x1f8] sm:$0xff] %v2983
    // Predicated region
    $region30: #{tpu_custom_call.1} parent=1 // pred_check
      _
    $region31: #{tpu_custom_call.1} parent=1 // pred_check_branch
      %3049 = sbr.rel (0) target = $region33
    $region32: #{tpu_custom_call.1} parent=1 // pred_region
      %s3051 = ssub.s32 8192, 8192
      %3052 = vsyncadd [#allocation4], %s3051
      %s3053 = sshll.u32 [#allocation8], 4
      %s3054 = int_to_ptr.vmem [resolvable:$true] %s3053
      %3059 = dma.vmem_to_hbm [thread:$0]  %s3054, 8192, %s4, [#allocation4], 128, 128, 8
    $region33: #{tpu_custom_call.1} parent=1 // pred_fallthru
      _
    // Predicated region
    $region34: #{tpu_custom_call.1} parent=1 // pred_check
      _
    $region35: #{tpu_custom_call.1} parent=1 // pred_check_branch
      %3061 = sbr.rel (0) target = $region37
    $region36: #{tpu_custom_call.1} parent=1 // pred_region
      %3062 = dma.done [#allocation4], 8192
    $region37: #{tpu_custom_call.1} parent=1 // pred_fallthru
      _
    %3063 = vsyncpa [#allocation3], 1
    %3064 = vsyncpa [#allocation6], 1
    %3065 = vsyncpa [#allocation4], 1

</llo_original>
